<compile_context>
chip_gen: v5e
topology: v5e:2x2
jax: 0.10.0
libtpu: 0.0.40
codegen_flags: <defaults>
</compile_context>

<pallas_src>
import functools

import jax
import jax.numpy as jnp
from jax import lax
from jax.experimental import pallas as pl
from jax.experimental.pallas import tpu as pltpu


# ----------------------------------------------------------------------------
# Pallas kernel: fused (transposed-LHS) matmul + bias, multi-head outputs.
# ----------------------------------------------------------------------------
def _head_kernel(x_ref, w_ref, b_ref, *out_refs, col_splits):
    # x_ref: (C_in, tile_hw)   -- channel-major slab (transpose fused in-kernel)
    # w_ref: (C_in, N_total)   -- fused weights, resident across the grid
    # b_ref: (1, N_total)      -- fused bias
    # out_refs[i]: (tile_hw, n_i)
    acc = lax.dot_general(
        x_ref[...], w_ref[...],
        dimension_numbers=(((0,), (0,)), ((), ())),   # contract C on both sides
        preferred_element_type=jnp.float32,
    )                                                  # (tile_hw, N_total) f32
    acc = acc + b_ref[...]                             # VPU filler, free
    for o_ref, (start, size) in zip(out_refs, col_splits):
        o_ref[...] = acc[:, start:start + size].astype(o_ref.dtype)


def _round_up(x, m):
    return (x + m - 1) // m * m


def _choose_tile_hw(hw, batch, target):
    """Pick a 128-multiple spatial tile.

    Prefers a tile that divides HW exactly (no pad / slice-off HBM pass), as
    large as possible up to `target`, while keeping >= 2 total grid steps so
    both v7x TensorCores get work.
    """
    target = max(128, _round_up(target, 128))

    def ok(t):
        return t == 128 or batch * pl.cdiv(hw, t) >= 2

    # 1) exact-divisor candidates (no padding needed).
    if hw % 128 == 0:
        t = min(target, hw)
        while t >= 128:
            if hw % t == 0 and ok(t):
                return t
            t -= 128
    # 2) fallback: largest 128-multiple <= target (ragged tail zero-padded).
    t = min(target, _round_up(hw, 128))
    while not ok(t) and t > 128:
        t -= 128
    return t


def multi_head_1x1(x_nchw, w_all, b_all, col_splits, *,
                   compute_dtype=None, out_dtype=None, tile_hw_target=2048):
    """Fused multi-head 1x1 conv.

    x_nchw: (B, C_in, H, W); w_all: (C_in, N_total); b_all: (N_total,).
    col_splits: tuple of (start, size) column ranges, one per head.
    Returns a tuple of (B, H, W, size_i) arrays in the same order.
    """
    B, C, H, W = x_nchw.shape
    HW = H * W
    N_total = w_all.shape[1]
    out_dtype = out_dtype if out_dtype is not None else x_nchw.dtype

    x = x_nchw.reshape(B, C, HW)                       # free reshape, stays NC(HW)
    if compute_dtype is not None:
        x = x.astype(compute_dtype)
        w = w_all.astype(compute_dtype)
    else:
        w = w_all
    b2 = b_all.reshape(1, N_total).astype(jnp.float32)

    tile_hw = _choose_tile_hw(HW, B, tile_hw_target)
    grid_hw = pl.cdiv(HW, tile_hw)
    HWp = grid_hw * tile_hw
    if HWp != HW:                                      # ragged tail -> zero pad
        x = jnp.pad(x, ((0, 0), (0, 0), (0, HWp - HW)))

    in_bytes = (x.size * x.dtype.itemsize + w.size * w.dtype.itemsize
                + b2.size * b2.dtype.itemsize)
    out_bytes = B * HWp * N_total * jnp.dtype(out_dtype).itemsize

    kernel = functools.partial(_head_kernel, col_splits=tuple(col_splits))
    outs = pl.pallas_call(
        kernel,
        out_shape=tuple(
            jax.ShapeDtypeStruct((B, HWp, n), out_dtype) for _, n in col_splits
        ),
        grid_spec=pltpu.PrefetchScalarGridSpec(
            num_scalar_prefetch=0,
            grid=(B, grid_hw),
            in_specs=[
                pl.BlockSpec((pl.Squeezed(), C, tile_hw), lambda b, j: (b, 0, j)),
                pl.BlockSpec((C, N_total), lambda b, j: (0, 0)),
                pl.BlockSpec((1, N_total), lambda b, j: (0, 0)),
            ],
            out_specs=tuple(
                pl.BlockSpec((pl.Squeezed(), tile_hw, n), lambda b, j: (b, j, 0))
                for _, n in col_splits
            ),
        ),
        compiler_params=pltpu.CompilerParams(
            dimension_semantics=("parallel", "parallel"),
        ),
        cost_estimate=pl.CostEstimate(
            flops=2 * B * HWp * C * N_total,
            transcendentals=0,
            bytes_accessed=in_bytes + out_bytes,
        ),
    )(x, w, b2)

    if HWp != HW:
        outs = tuple(o[:, :HW, :] for o in outs)
    return tuple(o.reshape(B, H, W, o.shape[-1]) for o in outs)


# ----------------------------------------------------------------------------
# MultiGroupHead (forward only) in JAX, hot path in Pallas.
# ----------------------------------------------------------------------------
class MultiGroupHeadPallas:
    def __init__(self, key, *, in_channels, num_classes, num_dirs, code_size,
                 use_dir=True, pred_var=True, encode_background_as_zeros=True,
                 bev_only=False):
        self.use_dir = use_dir
        self.pred_var = pred_var
        num_anchor_per_loc = num_dirs * num_classes
        box_code_size = code_size * num_classes
        if encode_background_as_zeros:
            num_cls = num_anchor_per_loc * num_classes
        else:
            num_cls = num_anchor_per_loc * (num_classes + 1)
        num_pred = num_anchor_per_loc * (box_code_size - 2 if bev_only else box_code_size)
        num_iou = num_anchor_per_loc
        num_dir = num_anchor_per_loc * 2 if use_dir else 0

        self.num_pred, self.num_cls = num_pred, num_cls
        self.num_iou, self.num_dir = num_iou, num_dir

        # Deterministic parameter init (shapes match the PyTorch 1x1 Conv2d's;
        # weights stored as (C_in, C_out) i.e. transposed conv weight).
        ks = jax.random.split(key, 8)
        bound = 1.0 / jnp.sqrt(in_channels)

        def uni(k, shape):
            return jax.random.uniform(k, shape, jnp.float32, -bound, bound)

        self.w_box = uni(ks[0], (in_channels, num_pred))
        self.b_box = uni(ks[1], (num_pred,))
        self.w_cls = uni(ks[2], (in_channels, num_cls))
        self.b_cls = uni(ks[3], (num_cls,))
        self.w_iou = uni(ks[4], (in_channels, num_iou))      # conv_iou: no bias
        self.b_iou = jnp.zeros((num_iou,), jnp.float32)
        if use_dir:
            self.w_dir = uni(ks[5], (in_channels, num_dir))
            self.b_dir = uni(ks[6], (num_dir,))
        if pred_var:
            # torch.nn.init.normal_(std=1e-4), bias = 0
            self.w_var = 1e-4 * jax.random.normal(ks[7], (in_channels, num_pred),
                                                  jnp.float32)
            self.b_var = jnp.zeros((num_pred,), jnp.float32)

        # Column order: box, var, cls, dir, iou — the two wide heads (56+56)
        # fill the first 128-lane group; no head slice crosses a lane group.
        heads = [("box_preds", self.w_box, self.b_box)]
        if pred_var:
            heads.append(("var_box_preds", self.w_var, self.b_var))
        heads.append(("cls_preds", self.w_cls, self.b_cls))
        if use_dir:
            heads.append(("dir_cls_preds", self.w_dir, self.b_dir))
        heads.append(("iou_preds", self.w_iou, self.b_iou))

        self.head_names = [n for n, _, _ in heads]
        self.w_all = jnp.concatenate([w for _, w, _ in heads], axis=1)
        self.b_all = jnp.concatenate([b for _, _, b in heads], axis=0)
        splits, off = [], 0
        for _, w, _ in heads:
            splits.append((off, w.shape[1]))
            off += w.shape[1]
        self.col_splits = tuple(splits)

    def __call__(self, x_nchw, *, compute_dtype=None, tile_hw_target=2048):
        """x_nchw: (B, C_in, H, W) — same convention as the PyTorch module."""
        outs = multi_head_1x1(
            x_nchw, self.w_all, self.b_all, self.col_splits,
            compute_dtype=compute_dtype, out_dtype=jnp.float32,
            tile_hw_target=tile_hw_target)
        ret = dict(zip(self.head_names, outs))
        B = x_nchw.shape[0]
        if not self.use_dir:
            ret["dir_cls_preds"] = jnp.zeros((B, 1, 2), jnp.float32)
        if not self.pred_var:
            ret["var_box_preds"] = jnp.zeros((B,), jnp.float32)
        return ret


if __name__ == "__main__":
    key = jax.random.PRNGKey(0)
    k_param, k_x = jax.random.split(key)

    # Config consistent with MultiGroupHead.__init__:
    #   num_classes=2, num_dirs=2 -> num_anchor_per_loc=4
    #   code_size=7 -> box_code_size=14 -> num_pred=56, num_cls=8,
    #   num_dir=8, num_iou=4, pred_var=True, use_dir_classifier=True
    head = MultiGroupHeadPallas(
        k_param, in_channels=32, num_classes=2, num_dirs=2, code_size=7,
        use_dir=True, pred_var=True, encode_background_as_zeros=True,
        bev_only=False)

    # Input (NCHW, like the PyTorch module): B=2, C=32, H=16, W=16
    x = jax.random.normal(k_x, (2, 32, 16, 16), jnp.float32)

    out = head(x)                      # f32 operands
    jax.block_until_ready(out)

    # Reference: 1x1 conv == per-pixel matmul over channels.
    x_flat = jnp.transpose(x, (0, 2, 3, 1)).reshape(-1, 32)
    ref = x_flat @ head.w_all + head.b_all

    def fuse(d):
        return jnp.concatenate(
            [d["box_preds"].reshape(-1, head.num_pred),
             d["var_box_preds"].reshape(-1, head.num_pred),
             d["cls_preds"].reshape(-1, head.num_cls),
             d["dir_cls_preds"].reshape(-1, head.num_dir),
             d["iou_preds"].reshape(-1, head.num_iou)], axis=1)

    assert jnp.allclose(fuse(out), ref, atol=1e-4, rtol=1e-4), "f32 mismatch vs reference"
    assert out["box_preds"].shape == (2, 16, 16, 56)
    assert out["cls_preds"].shape == (2, 16, 16, 8)
    assert out["dir_cls_preds"].shape == (2, 16, 16, 8)
    assert out["var_box_preds"].shape == (2, 16, 16, 56)
    assert out["iou_preds"].shape == (2, 16, 16, 4)

    # bf16 operand path (halves input/weight HBM traffic; f32 accumulate).
    out_bf16 = head(x, compute_dtype=jnp.bfloat16)
    jax.block_until_ready(out_bf16)
    assert jnp.allclose(fuse(out_bf16), ref, atol=1e-1, rtol=1e-1), "bf16 mismatch vs reference"

    # Ragged-spatial path (H*W not a multiple of 128) exercises the pad/slice fallback.
    x_ragged = jax.random.normal(k_x, (2, 32, 10, 10), jnp.float32)
    out_r = head(x_ragged)
    jax.block_until_ready(out_r)
    xr_flat = jnp.transpose(x_ragged, (0, 2, 3, 1)).reshape(-1, 32)
    ref_r = xr_flat @ head.w_all + head.b_all
    assert jnp.allclose(fuse(out_r), ref_r, atol=1e-4, rtol=1e-4), "ragged mismatch vs reference"

    # TODO(synk): MultiGroupHead.loss / post_processing (NMS, IoU3D) are host-level
    # training/inference glue, not part of forward; intentionally not ported.
    print("KERNEL_OK")
</pallas_src>

<mosaic_0001>
module attributes {stable_mosaic.version = 11 : i64} {
  func.func @_head_kernel(%arg0: i32, %arg1: i32, %arg2: memref<1x32x256xf32, #tpu.memory_space<vmem>>, %arg3: memref<32x132xf32, #tpu.memory_space<vmem>>, %arg4: memref<1x132xf32, #tpu.memory_space<vmem>>, %arg5: memref<1x256x56xf32, #tpu.memory_space<vmem>>, %arg6: memref<1x256x56xf32, #tpu.memory_space<vmem>>, %arg7: memref<1x256x8xf32, #tpu.memory_space<vmem>>, %arg8: memref<1x256x8xf32, #tpu.memory_space<vmem>>, %arg9: memref<1x256x4xf32, #tpu.memory_space<vmem>>) attributes {dimension_semantics = [#tpu.dimension_semantics<parallel>, #tpu.dimension_semantics<parallel>], iteration_bounds = array<i64: 2, 1>, scalar_prefetch = 0 : i64, scratch_operands = 0 : i64, tpu.core_type = #tpu.core_type<tc>, window_params = [{transform_indices = @transform_0, window_bounds = array<i64: 1, 32, 256>}, {pipeline_mode = #tpu.pipeline_mode<synchronous>, transform_indices = @transform_1, window_bounds = array<i64: 32, 132>}, {pipeline_mode = #tpu.pipeline_mode<synchronous>, transform_indices = @transform_2, window_bounds = array<i64: 1, 132>}, {transform_indices = @transform_3, window_bounds = array<i64: 1, 256, 56>}, {transform_indices = @transform_4, window_bounds = array<i64: 1, 256, 56>}, {transform_indices = @transform_5, window_bounds = array<i64: 1, 256, 8>}, {transform_indices = @transform_6, window_bounds = array<i64: 1, 256, 8>}, {transform_indices = @transform_7, window_bounds = array<i64: 1, 256, 4>}]} {
    %c0 = arith.constant 0 : index
    %c0_0 = arith.constant 0 : index
    %c0_1 = arith.constant 0 : index
    %0 = vector.load %arg2[%c0, %c0_0, %c0_1] : memref<1x32x256xf32, #tpu.memory_space<vmem>>, vector<1x32x256xf32>
    %1 = vector.shape_cast %0 : vector<1x32x256xf32> to vector<32x256xf32>
    %c0_2 = arith.constant 0 : index
    %c0_3 = arith.constant 0 : index
    %2 = vector.load %arg3[%c0_2, %c0_3] : memref<32x132xf32, #tpu.memory_space<vmem>>, vector<32x132xf32>
    %cst = arith.constant dense<0.000000e+00> : vector<256x132xf32>
    %3 = tpu.matmul %1, %2, %cst {dimension_numbers = #tpu.dot_dimension_numbers<[0], [0], [1], [1], [0, 1, 1, 1], [], []>} : vector<32x256xf32>, vector<32x132xf32>, vector<256x132xf32> -> vector<256x132xf32>
    %c0_4 = arith.constant 0 : index
    %c0_5 = arith.constant 0 : index
    %4 = vector.load %arg4[%c0_4, %c0_5] : memref<1x132xf32, #tpu.memory_space<vmem>>, vector<1x132xf32>
    %5 = vector.broadcast %4 : vector<1x132xf32> to vector<256x132xf32>
    %6 = arith.addf %3, %5 : vector<256x132xf32>
    %7 = vector.extract_strided_slice %6 {offsets = [0, 0], sizes = [256, 56], strides = [1, 1]} : vector<256x132xf32> to vector<256x56xf32>
    %c0_6 = arith.constant 0 : index
    %c0_7 = arith.constant 0 : index
    %c0_8 = arith.constant 0 : index
    %8 = vector.load %arg5[%c0_6, %c0_7, %c0_8] : memref<1x256x56xf32, #tpu.memory_space<vmem>>, vector<1x256x56xf32>
    %9 = vector.shape_cast %8 : vector<1x256x56xf32> to vector<256x56xf32>
    %10 = vector.shape_cast %7 : vector<256x56xf32> to vector<1x256x56xf32>
    tpu.vector_store %arg5[%c0_6, %c0_7, %c0_8], %10 {strides = array<i32>} : memref<1x256x56xf32, #tpu.memory_space<vmem>>, vector<1x256x56xf32>,
    %11 = vector.extract_strided_slice %6 {offsets = [0, 56], sizes = [256, 56], strides = [1, 1]} : vector<256x132xf32> to vector<256x56xf32>
    %c0_9 = arith.constant 0 : index
    %c0_10 = arith.constant 0 : index
    %c0_11 = arith.constant 0 : index
    %12 = vector.load %arg6[%c0_9, %c0_10, %c0_11] : memref<1x256x56xf32, #tpu.memory_space<vmem>>, vector<1x256x56xf32>
    %13 = vector.shape_cast %12 : vector<1x256x56xf32> to vector<256x56xf32>
    %14 = vector.shape_cast %11 : vector<256x56xf32> to vector<1x256x56xf32>
    tpu.vector_store %arg6[%c0_9, %c0_10, %c0_11], %14 {strides = array<i32>} : memref<1x256x56xf32, #tpu.memory_space<vmem>>, vector<1x256x56xf32>,
    %15 = vector.extract_strided_slice %6 {offsets = [0, 112], sizes = [256, 8], strides = [1, 1]} : vector<256x132xf32> to vector<256x8xf32>
    %c0_12 = arith.constant 0 : index
    %c0_13 = arith.constant 0 : index
    %c0_14 = arith.constant 0 : index
    %16 = vector.load %arg7[%c0_12, %c0_13, %c0_14] : memref<1x256x8xf32, #tpu.memory_space<vmem>>, vector<1x256x8xf32>
    %17 = vector.shape_cast %16 : vector<1x256x8xf32> to vector<256x8xf32>
    %18 = vector.shape_cast %15 : vector<256x8xf32> to vector<1x256x8xf32>
    tpu.vector_store %arg7[%c0_12, %c0_13, %c0_14], %18 {strides = array<i32>} : memref<1x256x8xf32, #tpu.memory_space<vmem>>, vector<1x256x8xf32>,
    %19 = vector.extract_strided_slice %6 {offsets = [0, 120], sizes = [256, 8], strides = [1, 1]} : vector<256x132xf32> to vector<256x8xf32>
    %c0_15 = arith.constant 0 : index
    %c0_16 = arith.constant 0 : index
    %c0_17 = arith.constant 0 : index
    %20 = vector.load %arg8[%c0_15, %c0_16, %c0_17] : memref<1x256x8xf32, #tpu.memory_space<vmem>>, vector<1x256x8xf32>
    %21 = vector.shape_cast %20 : vector<1x256x8xf32> to vector<256x8xf32>
    %22 = vector.shape_cast %19 : vector<256x8xf32> to vector<1x256x8xf32>
    tpu.vector_store %arg8[%c0_15, %c0_16, %c0_17], %22 {strides = array<i32>} : memref<1x256x8xf32, #tpu.memory_space<vmem>>, vector<1x256x8xf32>,
    %23 = vector.extract_strided_slice %6 {offsets = [0, 128], sizes = [256, 4], strides = [1, 1]} : vector<256x132xf32> to vector<256x4xf32>
    %c0_18 = arith.constant 0 : index
    %c0_19 = arith.constant 0 : index
    %c0_20 = arith.constant 0 : index
    %24 = vector.load %arg9[%c0_18, %c0_19, %c0_20] : memref<1x256x4xf32, #tpu.memory_space<vmem>>, vector<1x256x4xf32>
    %25 = vector.shape_cast %24 : vector<1x256x4xf32> to vector<256x4xf32>
    %26 = vector.shape_cast %23 : vector<256x4xf32> to vector<1x256x4xf32>
    tpu.vector_store %arg9[%c0_18, %c0_19, %c0_20], %26 {strides = array<i32>} : memref<1x256x4xf32, #tpu.memory_space<vmem>>, vector<1x256x4xf32>,
    return
  }
  func.func @transform_0(%arg0: i32, %arg1: i32) -> (i32, i32, i32) {
    %c0_i32 = arith.constant 0 : i32
    %c0_i32_0 = arith.constant 0 : i32
    return %arg0, %c0_i32, %arg1 : i32, i32, i32
  }
  func.func @transform_1(%arg0: i32, %arg1: i32) -> (i32, i32) {
    %c0_i32 = arith.constant 0 : i32
    %c0_i32_0 = arith.constant 0 : i32
    %c0_i32_1 = arith.constant 0 : i32
    return %c0_i32, %c0_i32_0 : i32, i32
  }
  func.func @transform_2(%arg0: i32, %arg1: i32) -> (i32, i32) {
    %c0_i32 = arith.constant 0 : i32
    %c0_i32_0 = arith.constant 0 : i32
    %c0_i32_1 = arith.constant 0 : i32
    return %c0_i32, %c0_i32_0 : i32, i32
  }
  func.func @transform_3(%arg0: i32, %arg1: i32) -> (i32, i32, i32) {
    %c0_i32 = arith.constant 0 : i32
    %c0_i32_0 = arith.constant 0 : i32
    return %arg0, %arg1, %c0_i32 : i32, i32, i32
  }
  func.func @transform_4(%arg0: i32, %arg1: i32) -> (i32, i32, i32) {
    %c0_i32 = arith.constant 0 : i32
    %c0_i32_0 = arith.constant 0 : i32
    return %arg0, %arg1, %c0_i32 : i32, i32, i32
  }
  func.func @transform_5(%arg0: i32, %arg1: i32) -> (i32, i32, i32) {
    %c0_i32 = arith.constant 0 : i32
    %c0_i32_0 = arith.constant 0 : i32
    return %arg0, %arg1, %c0_i32 : i32, i32, i32
  }
  func.func @transform_6(%arg0: i32, %arg1: i32) -> (i32, i32, i32) {
    %c0_i32 = arith.constant 0 : i32
    %c0_i32_0 = arith.constant 0 : i32
    return %arg0, %arg1, %c0_i32 : i32, i32, i32
  }
  func.func @transform_7(%arg0: i32, %arg1: i32) -> (i32, i32, i32) {
    %c0_i32 = arith.constant 0 : i32
    %c0_i32_0 = arith.constant 0 : i32
    return %arg0, %arg1, %c0_i32 : i32, i32, i32
  }
}

</mosaic_0001>

<llo_original>
// kernel: tpu_custom_call.1
$region0: #{tpu_custom_call.1}
  #allocation0 [shape = 'u32[]', space=smem, size = 0x4, offset = 0x4, fixed_abs, tag = 'smem constant byte address 0x4 - core index']
  #allocation1 [shape = 'u32[72,128]{1,0:T(1,128)}', space=vmem, size = 0x9000, scoped, tag = 'internal scratch']
  %s0 = inlined_call_operand.hbm [shape: f32[2,32,256], index: 0, kind: input, shape index: {}]
  %s1 = inlined_call_operand.hbm [shape: f32[32,132], index: 1, kind: input, shape index: {}]
  %s2 = inlined_call_operand.hbm [shape: f32[1,132], index: 2, kind: input, shape index: {}]
  %s3 = inlined_call_operand.vmem [shape: f32[2,256,56], index: 3, kind: output, shape index: {0}]
  %s4 = inlined_call_operand.vmem [shape: f32[2,256,56], index: 4, kind: output, shape index: {1}]
  %s5 = inlined_call_operand.vmem [shape: f32[2,256,8], index: 5, kind: output, shape index: {2}]
  %s6 = inlined_call_operand.vmem [shape: f32[2,256,8], index: 6, kind: output, shape index: {3}]
  %s7 = inlined_call_operand.vmem [shape: f32[2,256,4], index: 7, kind: output, shape index: {4}]
  %8 = xla_tuple %s3, %s4, %s5, %s6, %s7
  %s9 = sld [smem:[#allocation0]]
  $region89: #{tpu_custom_call.1} parent=0
    _
  %s11 = ssub.s32 1, %s9
  %s12 = scalar_select 0, %s11, %s9
  $region1: #{tpu_custom_call.1} parent=0
    #allocation2 [shape = 'u8[65536]{0}', space=vmem, size = 0x10000, scoped, tag = 'input window, operand 0']
    #allocation3 [shape = 's32[2]{0}', space=sflag, size = 0x8, scoped, tag = 'scoped memory for tpu_custom_call.1']
    #allocation4 [shape = 'u8[32768]{0}', space=vmem, size = 0x8000, scoped, tag = 'input window, operand 1, single buffered']
    #allocation5 [shape = 's32[1]{0}', space=sflag, size = 0x4, scoped, tag = 'scoped memory for tpu_custom_call.1']
    #allocation6 [shape = 'u8[1024]{0}', space=vmem, size = 0x400, scoped, tag = 'input window, operand 2, single buffered']
    %13 = vsyncpa [#allocation3], 0
    %s14 = scalar_lea.sflag [#allocation3], 1
    %15 = vsyncpa %s14, 0
    %16 = vsyncpa [#allocation5], 0
    loop: start=0, step=1, limit=4
    $region2: #{tpu_custom_call.1} parent=1 // loop_pre_header
      _
    $region3: #{tpu_custom_call.1} parent=1 // loop_header
      %s18 = sphi 0, %s22
      %p19 = scmp.ge.s32.totalorder %s18, 4
      %s25 = sphi 0, %s37
      %s26 = sphi 0, %s33
      %s27 = sphi 0, %s25
      %s28 = sphi 0, %s26
      %s29 = sphi 0, %s27
      %s30 = sphi 0, %s28
      %s42 = sphi 0, %s44
      %s45 = sphi 0, %s42
      %s46 = sphi 0, %s45
      %s62 = sphi 0, %s46
      %s66 = sphi 0, %s66
      %s68 = sphi 0, %s66
      %s69 = sphi 0, %s68
      %s83 = sphi 0, %s69
      %s87 = sphi 0, %s87
      %s89 = sphi 0, %s87
      %s90 = sphi 0, %s89
      %s104 = sphi 0, %s90
      %s112 = sphi 0, %s114
      %s115 = sphi 0, %s112
      %s116 = sphi 0, %s115
      %s132 = sphi 0, %s116
      %s140 = sphi 0, %s142
      %s143 = sphi 0, %s140
      %s144 = sphi 0, %s143
      %s160 = sphi 0, %s144
      %s168 = sphi 0, %s170
      %s171 = sphi 0, %s168
      %s172 = sphi 0, %s171
      %s188 = sphi 0, %s172
      %s196 = sphi 0, %s198
      %s199 = sphi 0, %s196
      %s200 = sphi 0, %s199
      %s216 = sphi 0, %s200
      %s224 = sphi 0, %s226
      %s227 = sphi 0, %s224
      %s228 = sphi 0, %s227
      %s244 = sphi 0, %s228
    $region4: #{tpu_custom_call.1} parent=1 // loop_header_branch
      %21 = sbr.rel (%p19) target = $region8
    $region5: #{tpu_custom_call.1} parent=1 // loop_body
      %s23 = ssub.s32 %s18, 1
      %s24 = ssub.s32 %s18, 2
      %s31 = sadd.s32 1, %s26
      %p32 = scmp.ge.s32.totalorder %s31, 1
      %s33 = scalar_select %p32, 0, %s31
      %s34 = sadd.s32 1, %s25
      %s35 = scalar_select %p32, %s34, %s25
      %p36 = scmp.ge.s32.totalorder %s35, 2
      %s37 = scalar_select %p36, 0, %s35
      %s38 = ssub.s32 %s25, %s37
      %s39 = ssub.s32 %s26, %s33
      %s40 = sor.u32 %s38, %s39
      %p41 = scmp.eq.s32.totalorder %s40, 0
      %s43 = sadd.s32 %s42, 1
      %s44 = scalar_select %p41, %s42, %s43
      %p47 = pneg %p41
      %p48 = scmp.eq.s32.totalorder %s18, 1
      %p49 = por %p47, %p48
      %p50 = scmp.ne.s32.totalorder %s42, %s45
      %p51 = scmp.eq.s32.totalorder %s18, 0
      %p52 = por %p50, %p51
      %p53 = scmp.ne.s32.totalorder %s42, %s45
      %p54 = scmp.eq.s32.totalorder %s23, 1
      %p55 = por %p53, %p54
      %p56 = scmp.ne.s32.totalorder %s45, %s46
      %p57 = scmp.eq.s32.totalorder %s23, 0
      %p58 = por %p56, %p57
      %p59 = scmp.ne.s32.totalorder %s45, %s46
      %p60 = scmp.eq.s32.totalorder %s24, 1
      %p61 = por %p59, %p60
      %p63 = scmp.ne.s32.totalorder %s46, %s62
      %p64 = scmp.eq.s32.totalorder %s24, 0
      %p65 = por %p63, %p64
      %s67 = sadd.s32 %s66, 1
      %p70 = scmp.eq.s32.totalorder %s18, 1
      %p71 = scmp.ne.s32.totalorder %s66, %s68
      %p72 = scmp.eq.s32.totalorder %s18, 0
      %p73 = por %p71, %p72
      %p74 = scmp.ne.s32.totalorder %s66, %s68
      %p75 = scmp.eq.s32.totalorder %s23, 1
      %p76 = por %p74, %p75
      %p77 = scmp.ne.s32.totalorder %s68, %s69
      %p78 = scmp.eq.s32.totalorder %s23, 0
      %p79 = por %p77, %p78
      %p80 = scmp.ne.s32.totalorder %s68, %s69
      %p81 = scmp.eq.s32.totalorder %s24, 1
      %p82 = por %p80, %p81
      %p84 = scmp.ne.s32.totalorder %s69, %s83
      %p85 = scmp.eq.s32.totalorder %s24, 0
      %p86 = por %p84, %p85
      %s88 = sadd.s32 %s87, 1
      %p91 = scmp.eq.s32.totalorder %s18, 1
      %p92 = scmp.ne.s32.totalorder %s87, %s89
      %p93 = scmp.eq.s32.totalorder %s18, 0
      %p94 = por %p92, %p93
      %p95 = scmp.ne.s32.totalorder %s87, %s89
      %p96 = scmp.eq.s32.totalorder %s23, 1
      %p97 = por %p95, %p96
      %p98 = scmp.ne.s32.totalorder %s89, %s90
      %p99 = scmp.eq.s32.totalorder %s23, 0
      %p100 = por %p98, %p99
      %p101 = scmp.ne.s32.totalorder %s89, %s90
      %p102 = scmp.eq.s32.totalorder %s24, 1
      %p103 = por %p101, %p102
      %p105 = scmp.ne.s32.totalorder %s90, %s104
      %p106 = scmp.eq.s32.totalorder %s24, 0
      %p107 = por %p105, %p106
      %s108 = ssub.s32 %s25, %s37
      %s109 = ssub.s32 %s26, %s33
      %s110 = sor.u32 %s108, %s109
      %p111 = scmp.eq.s32.totalorder %s110, 0
      %s113 = sadd.s32 %s112, 1
      %s114 = scalar_select %p111, %s112, %s113
      %p117 = pneg %p111
      %p118 = scmp.eq.s32.totalorder %s18, 1
      %p119 = por %p117, %p118
      %p120 = scmp.ne.s32.totalorder %s112, %s115
      %p121 = scmp.eq.s32.totalorder %s18, 0
      %p122 = por %p120, %p121
      %p123 = scmp.ne.s32.totalorder %s112, %s115
      %p124 = scmp.eq.s32.totalorder %s23, 1
      %p125 = por %p123, %p124
      %p126 = scmp.ne.s32.totalorder %s115, %s116
      %p127 = scmp.eq.s32.totalorder %s23, 0
      %p128 = por %p126, %p127
      %p129 = scmp.ne.s32.totalorder %s115, %s116
      %p130 = scmp.eq.s32.totalorder %s24, 1
      %p131 = por %p129, %p130
      %p133 = scmp.ne.s32.totalorder %s116, %s132
      %p134 = scmp.eq.s32.totalorder %s24, 0
      %p135 = por %p133, %p134
      %s136 = ssub.s32 %s25, %s37
      %s137 = ssub.s32 %s26, %s33
      %s138 = sor.u32 %s136, %s137
      %p139 = scmp.eq.s32.totalorder %s138, 0
      %s141 = sadd.s32 %s140, 1
      %s142 = scalar_select %p139, %s140, %s141
      %p145 = pneg %p139
      %p146 = scmp.eq.s32.totalorder %s18, 1
      %p147 = por %p145, %p146
      %p148 = scmp.ne.s32.totalorder %s140, %s143
      %p149 = scmp.eq.s32.totalorder %s18, 0
      %p150 = por %p148, %p149
      %p151 = scmp.ne.s32.totalorder %s140, %s143
      %p152 = scmp.eq.s32.totalorder %s23, 1
      %p153 = por %p151, %p152
      %p154 = scmp.ne.s32.totalorder %s143, %s144
      %p155 = scmp.eq.s32.totalorder %s23, 0
      %p156 = por %p154, %p155
      %p157 = scmp.ne.s32.totalorder %s143, %s144
      %p158 = scmp.eq.s32.totalorder %s24, 1
      %p159 = por %p157, %p158
      %p161 = scmp.ne.s32.totalorder %s144, %s160
      %p162 = scmp.eq.s32.totalorder %s24, 0
      %p163 = por %p161, %p162
      %s164 = ssub.s32 %s25, %s37
      %s165 = ssub.s32 %s26, %s33
      %s166 = sor.u32 %s164, %s165
      %p167 = scmp.eq.s32.totalorder %s166, 0
      %s169 = sadd.s32 %s168, 1
      %s170 = scalar_select %p167, %s168, %s169
      %p173 = pneg %p167
      %p174 = scmp.eq.s32.totalorder %s18, 1
      %p175 = por %p173, %p174
      %p176 = scmp.ne.s32.totalorder %s168, %s171
      %p177 = scmp.eq.s32.totalorder %s18, 0
      %p178 = por %p176, %p177
      %p179 = scmp.ne.s32.totalorder %s168, %s171
      %p180 = scmp.eq.s32.totalorder %s23, 1
      %p181 = por %p179, %p180
      %p182 = scmp.ne.s32.totalorder %s171, %s172
      %p183 = scmp.eq.s32.totalorder %s23, 0
      %p184 = por %p182, %p183
      %p185 = scmp.ne.s32.totalorder %s171, %s172
      %p186 = scmp.eq.s32.totalorder %s24, 1
      %p187 = por %p185, %p186
      %p189 = scmp.ne.s32.totalorder %s172, %s188
      %p190 = scmp.eq.s32.totalorder %s24, 0
      %p191 = por %p189, %p190
      %s192 = ssub.s32 %s25, %s37
      %s193 = ssub.s32 %s26, %s33
      %s194 = sor.u32 %s192, %s193
      %p195 = scmp.eq.s32.totalorder %s194, 0
      %s197 = sadd.s32 %s196, 1
      %s198 = scalar_select %p195, %s196, %s197
      %p201 = pneg %p195
      %p202 = scmp.eq.s32.totalorder %s18, 1
      %p203 = por %p201, %p202
      %p204 = scmp.ne.s32.totalorder %s196, %s199
      %p205 = scmp.eq.s32.totalorder %s18, 0
      %p206 = por %p204, %p205
      %p207 = scmp.ne.s32.totalorder %s196, %s199
      %p208 = scmp.eq.s32.totalorder %s23, 1
      %p209 = por %p207, %p208
      %p210 = scmp.ne.s32.totalorder %s199, %s200
      %p211 = scmp.eq.s32.totalorder %s23, 0
      %p212 = por %p210, %p211
      %p213 = scmp.ne.s32.totalorder %s199, %s200
      %p214 = scmp.eq.s32.totalorder %s24, 1
      %p215 = por %p213, %p214
      %p217 = scmp.ne.s32.totalorder %s200, %s216
      %p218 = scmp.eq.s32.totalorder %s24, 0
      %p219 = por %p217, %p218
      %s220 = ssub.s32 %s25, %s37
      %s221 = ssub.s32 %s26, %s33
      %s222 = sor.u32 %s220, %s221
      %p223 = scmp.eq.s32.totalorder %s222, 0
      %s225 = sadd.s32 %s224, 1
      %s226 = scalar_select %p223, %s224, %s225
      %p229 = pneg %p223
      %p230 = scmp.eq.s32.totalorder %s18, 1
      %p231 = por %p229, %p230
      %p232 = scmp.ne.s32.totalorder %s224, %s227
      %p233 = scmp.eq.s32.totalorder %s18, 0
      %p234 = por %p232, %p233
      %p235 = scmp.ne.s32.totalorder %s224, %s227
      %p236 = scmp.eq.s32.totalorder %s23, 1
      %p237 = por %p235, %p236
      %p238 = scmp.ne.s32.totalorder %s227, %s228
      %p239 = scmp.eq.s32.totalorder %s23, 0
      %p240 = por %p238, %p239
      %p241 = scmp.ne.s32.totalorder %s227, %s228
      %p242 = scmp.eq.s32.totalorder %s24, 1
      %p243 = por %p241, %p242
      %p245 = scmp.ne.s32.totalorder %s228, %s244
      %p246 = scmp.eq.s32.totalorder %s24, 0
      %p247 = por %p245, %p246
      %p248 = scmp.le.s32.totalorder 1, %s18
      %p249 = scmp.lt.s32.totalorder %s18, 3
      %p250 = pnand %p248, %p249
      %p251 = pneg %p250
      // Predicated region
      $region9: #{tpu_custom_call.1} parent=5 // pred_check
        _
      $region10: #{tpu_custom_call.1} parent=5 // pred_check_branch
        %253 = sbr.rel (%p250) target = $region12
      $region11: #{tpu_custom_call.1} parent=5 // pred_region
        %s254 = ssub.s32 %s18, 1
        // Predicated region
        $region13: #{tpu_custom_call.1} parent=11 // pred_check
          %p255 = pneg %p79
        $region14: #{tpu_custom_call.1} parent=11 // pred_check_branch
          %257 = sbr.rel (%p255) target = $region16
        $region15: #{tpu_custom_call.1} parent=11 // pred_region
          %259 = vsyncadd [#allocation5], 0
          %s260 = sshll.u32 %s1, 4
          %s261 = int_to_ptr.hbm [resolvable:$true] %s260
          %s262 = sshll.u32 [#allocation4], 4
          %s263 = int_to_ptr.vmem [resolvable:$true] %s262
          %268 = dma.hbm_to_vmem [thread:$0]  %s261, 1024, %s263, [#allocation5], 256, 256, 16
        $region16: #{tpu_custom_call.1} parent=11 // pred_fallthru
          _
        // Predicated region
        $region17: #{tpu_custom_call.1} parent=11 // pred_check
          %p269 = pneg %p100
        $region18: #{tpu_custom_call.1} parent=11 // pred_check_branch
          %271 = sbr.rel (%p269) target = $region20
        $region19: #{tpu_custom_call.1} parent=11 // pred_region
          %273 = vsyncadd [#allocation5], 0
          %s275 = sshll.u32 %s2, 4
          %s276 = int_to_ptr.hbm [resolvable:$true] %s275
          %s277 = sshll.u32 [#allocation6], 4
          %s278 = int_to_ptr.vmem [resolvable:$true] %s277
          %280 = dma.hbm_to_vmem [thread:$0]  %s276, 32, %s278, [#allocation5]
        $region20: #{tpu_custom_call.1} parent=11 // pred_fallthru
          _
      $region12: #{tpu_custom_call.1} parent=5 // pred_fallthru
        _
      %p281 = scmp.lt.s32.totalorder %s18, 2
      // Predicated region
      $region21: #{tpu_custom_call.1} parent=5 // pred_check
        %p282 = pneg %p281
      $region22: #{tpu_custom_call.1} parent=5 // pred_check_branch
        %284 = sbr.rel (%p282) target = $region24
      $region23: #{tpu_custom_call.1} parent=5 // pred_region
        // Predicated region
        $region25: #{tpu_custom_call.1} parent=23 // pred_check
          %p285 = pneg %p52
        $region26: #{tpu_custom_call.1} parent=23 // pred_check_branch
          %287 = sbr.rel (%p285) target = $region28
        $region27: #{tpu_custom_call.1} parent=23 // pred_region
          %s288 = sand.u32 %s42, 1
          %s289 = scalar_lea.sflag [#allocation3], %s288
          %s290 = sand.u32 %s42, 1
          %s291 = smul.addr %s290, 64
          %s292 = scalar_lea.vmem [#allocation2], %s291
          %s293 = smul.u32 2, %s26
          %295 = vsyncadd %s289, 0
          %s296 = smul.addr %s25, 8
          %s297 = sadd.s32 %s293, %s296
          %s298 = smul.addr %s297, 8
          %s299 = scalar_lea.hbm %s0, %s298
          %s300 = sshll.u32 %s299, 4
          %s301 = int_to_ptr.hbm [resolvable:$true] %s300
          %s302 = sshll.u32 %s292, 4
          %s303 = int_to_ptr.vmem [resolvable:$true] %s302
          %308 = dma.hbm_to_vmem [thread:$0]  %s301, 1024, %s303, %s289, 256, 256, 16
        $region28: #{tpu_custom_call.1} parent=23 // pred_fallthru
          _
      $region24: #{tpu_custom_call.1} parent=5 // pred_fallthru
        _
      %p309 = scmp.le.s32.totalorder 1, %s18
      %p310 = scmp.lt.s32.totalorder %s18, 3
      %p311 = pnand %p309, %p310
      %p312 = pneg %p311
      // Predicated region
      $region29: #{tpu_custom_call.1} parent=5 // pred_check
        _
      $region30: #{tpu_custom_call.1} parent=5 // pred_check_branch
        %314 = sbr.rel (%p311) target = $region32
      $region31: #{tpu_custom_call.1} parent=5 // pred_region
        %s315 = ssub.s32 %s18, 1
        %s316 = sand.u32 %s45, 1
        %s317 = scalar_lea.sflag [#allocation3], %s316
        %s318 = sand.u32 %s45, 1
        %s319 = smul.addr %s318, 64
        %s320 = scalar_lea.vmem [#allocation2], %s319
        // Predicated region
        $region33: #{tpu_custom_call.1} parent=31 // pred_check
          %p321 = pneg %p58
        $region34: #{tpu_custom_call.1} parent=31 // pred_check_branch
          %323 = sbr.rel (%p321) target = $region36
        $region35: #{tpu_custom_call.1} parent=31 // pred_region
          %325 = dma.done %s317, 1024
        $region36: #{tpu_custom_call.1} parent=31 // pred_fallthru
          _
        // Predicated region
        $region37: #{tpu_custom_call.1} parent=31 // pred_check
          %p326 = pneg %p79
        $region38: #{tpu_custom_call.1} parent=31 // pred_check_branch
          %328 = sbr.rel (%p326) target = $region40
        $region39: #{tpu_custom_call.1} parent=31 // pred_region
          %330 = dma.done [#allocation5], 1024
        $region40: #{tpu_custom_call.1} parent=31 // pred_fallthru
          _
        // Predicated region
        $region41: #{tpu_custom_call.1} parent=31 // pred_check
          %p331 = pneg %p100
        $region42: #{tpu_custom_call.1} parent=31 // pred_check_branch
          %333 = sbr.rel (%p331) target = $region44
        $region43: #{tpu_custom_call.1} parent=31 // pred_region
          %335 = dma.done [#allocation5], 32
        $region44: #{tpu_custom_call.1} parent=31 // pred_fallthru
          _
        %s336 = sand.u32 %s45, 1
        %s337 = scalar_lea.sflag [#allocation3], %s336
        %s338 = sand.u32 %s45, 1
        %s339 = smul.addr %s338, 64
        %s340 = scalar_lea.vmem [#allocation2], %s339
        %p341 = pneg %p58
        %p342 = pneg %p55
        %p343 = pneg %p79
        %p344 = pneg %p76
        %p345 = pneg %p100
        %p346 = pneg %p97
        %p347 = pneg %p128
        %p348 = pneg %p125
        %s349 = smul.u32 32, %s28
        %p350 = scmp.lt.s32.totalorder %s27, 1
        %s351 = scalar_select %p350, %s27, 1
        %p352 = scmp.lt.s32.totalorder %s349, 31
        %s353 = scalar_select %p352, %s349, 31
        %s354 = smul.addr %s351, 32
        %s355 = sadd.s32 %s353, %s354
        %s356 = smul.addr %s355, 8
        %s357 = scalar_lea.vmem %s3, %s356
        %p358 = pneg %p156
        %p359 = pneg %p153
        %s360 = smul.u32 32, %s28
        %p361 = scmp.lt.s32.totalorder %s27, 1
        %s362 = scalar_select %p361, %s27, 1
        %p363 = scmp.lt.s32.totalorder %s360, 31
        %s364 = scalar_select %p363, %s360, 31
        %s365 = smul.addr %s362, 32
        %s366 = sadd.s32 %s364, %s365
        %s367 = smul.addr %s366, 8
        %s368 = scalar_lea.vmem %s4, %s367
        %p369 = pneg %p184
        %p370 = pneg %p181
        %s371 = smul.u32 32, %s28
        %p372 = scmp.lt.s32.totalorder %s27, 1
        %s373 = scalar_select %p372, %s27, 1
        %p374 = scmp.lt.s32.totalorder %s371, 31
        %s375 = scalar_select %p374, %s371, 31
        %s376 = smul.addr %s373, 32
        %s377 = sadd.s32 %s375, %s376
        %s378 = smul.addr %s377, 8
        %s379 = scalar_lea.vmem %s5, %s378
        %p380 = pneg %p212
        %p381 = pneg %p209
        %s382 = smul.u32 32, %s28
        %p383 = scmp.lt.s32.totalorder %s27, 1
        %s384 = scalar_select %p383, %s27, 1
        %p385 = scmp.lt.s32.totalorder %s382, 31
        %s386 = scalar_select %p385, %s382, 31
        %s387 = smul.addr %s384, 32
        %s388 = sadd.s32 %s386, %s387
        %s389 = smul.addr %s388, 8
        %s390 = scalar_lea.vmem %s6, %s389
        %p391 = pneg %p240
        %p392 = pneg %p237
        %s393 = smul.u32 32, %s28
        %p394 = scmp.lt.s32.totalorder %s27, 1
        %s395 = scalar_select %p394, %s27, 1
        %p396 = scmp.lt.s32.totalorder %s393, 31
        %s397 = scalar_select %p396, %s393, 31
        %s398 = smul.addr %s395, 32
        %s399 = sadd.s32 %s397, %s398
        %s400 = smul.addr %s399, 8
        %s401 = scalar_lea.vmem %s7, %s400
        %s402 = smul.u32 2, %s28
        %s403 = smul.u32 32, %s28
        %p404 = scmp.lt.s32.totalorder %s27, 1
        %s405 = scalar_select %p404, %s27, 1
        %p406 = scmp.lt.s32.totalorder %s403, 31
        %s407 = scalar_select %p406, %s403, 31
        %s408 = smul.addr %s405, 32
        %s409 = sadd.s32 %s407, %s408
        %s410 = smul.addr %s409, 8
        %s411 = scalar_lea.vmem %s3, %s410
        %s412 = smul.u32 32, %s28
        %s413 = smul.u32 32, %s28
        %p414 = scmp.lt.s32.totalorder %s27, 1
        %s415 = scalar_select %p414, %s27, 1
        %p416 = scmp.lt.s32.totalorder %s413, 31
        %s417 = scalar_select %p416, %s413, 31
        %s418 = smul.addr %s415, 32
        %s419 = sadd.s32 %s417, %s418
        %s420 = smul.addr %s419, 8
        %s421 = scalar_lea.vmem %s4, %s420
        %s422 = smul.u32 32, %s28
        %s423 = smul.u32 32, %s28
        %p424 = scmp.lt.s32.totalorder %s27, 1
        %s425 = scalar_select %p424, %s27, 1
        %p426 = scmp.lt.s32.totalorder %s423, 31
        %s427 = scalar_select %p426, %s423, 31
        %s428 = smul.addr %s425, 32
        %s429 = sadd.s32 %s427, %s428
        %s430 = smul.addr %s429, 8
        %s431 = scalar_lea.vmem %s5, %s430
        %s432 = smul.u32 32, %s28
        %s433 = smul.u32 32, %s28
        %p434 = scmp.lt.s32.totalorder %s27, 1
        %s435 = scalar_select %p434, %s27, 1
        %p436 = scmp.lt.s32.totalorder %s433, 31
        %s437 = scalar_select %p436, %s433, 31
        %s438 = smul.addr %s435, 32
        %s439 = sadd.s32 %s437, %s438
        %s440 = smul.addr %s439, 8
        %s441 = scalar_lea.vmem %s6, %s440
        %s442 = smul.u32 32, %s28
        %s443 = smul.u32 32, %s28
        %p444 = scmp.lt.s32.totalorder %s27, 1
        %s445 = scalar_select %p444, %s27, 1
        %p446 = scmp.lt.s32.totalorder %s443, 31
        %s447 = scalar_select %p446, %s443, 31
        %s448 = smul.addr %s445, 32
        %s449 = sadd.s32 %s447, %s448
        %s450 = smul.addr %s449, 8
        %s451 = scalar_lea.vmem %s7, %s450
        %s452 = smul.u32 32, %s28
        %v453 = vld [vmem:[%s320] sm:$0xff]
        %v454 = vld [vmem:[%s320 + $0x8] sm:$0xff]
        %v455 = vld [vmem:[%s320 + $0x10] sm:$0xff]
        %v456 = vld [vmem:[%s320 + $0x18] sm:$0xff]
        %v457 = vld [vmem:[%s320 + $0x20] sm:$0xff]
        %v458 = vld [vmem:[%s320 + $0x28] sm:$0xff]
        %v459 = vld [vmem:[%s320 + $0x30] sm:$0xff]
        %v460 = vld [vmem:[%s320 + $0x38] sm:$0xff]
        %v461 = vld [vmem:[#allocation4] sm:$0xff]
        %v462 = vld [vmem:[#allocation4 + $0x8] sm:$0xff]
        %v463 = vld [vmem:[#allocation4 + $0x10] sm:$0xff]
        %v464 = vld [vmem:[#allocation4 + $0x18] sm:$0xff]
        %v465 = vld [vmem:[#allocation4 + $0x20] sm:$0xff]
        %v466 = vld [vmem:[#allocation4 + $0x28] sm:$0xff]
        %v467 = vld [vmem:[#allocation4 + $0x30] sm:$0xff]
        %v468 = vld [vmem:[#allocation4 + $0x38] sm:$0xff]
        %v469 = vld [vmem:[#allocation6] sm:$0x3]
        %v471 = vperm.slane %v469, 0
        %v472 = vperm.slane %v469, 1
        %475 = vxpose.xlu0.b32.start [1/16] %v453, 128
        %476 = vxpose.xlu0.b32.cont [2/16] %v455, 128
        %477 = vxpose.xlu0.b32.cont [3/16] %v457, 128
        %478 = vxpose.xlu0.b32.cont [4/16] %v459, 128
        %479 = vxpose.xlu0.b32.cont [5/16] 0.0, 128
        %480 = vxpose.xlu0.b32.cont [6/16] 0.0, 128
        %481 = vxpose.xlu0.b32.cont [7/16] 0.0, 128
        %482 = vxpose.xlu0.b32.cont [8/16] 0.0, 128
        %483 = vxpose.xlu0.b32.cont [9/16] 0.0, 128
        %484 = vxpose.xlu0.b32.cont [10/16] 0.0, 128
        %485 = vxpose.xlu0.b32.cont [11/16] 0.0, 128
        %486 = vxpose.xlu0.b32.cont [12/16] 0.0, 128
        %487 = vxpose.xlu0.b32.cont [13/16] 0.0, 128
        %488 = vxpose.xlu0.b32.cont [14/16] 0.0, 128
        %489 = vxpose.xlu0.b32.cont [15/16] 0.0, 128
        %490 = vxpose.xlu0.b32.end [16/16] 0.0, 128
        %v491 = vpop.trf.xlu0
        %v492 = vpop.trf.xlu0
        %v493 = vpop.trf.xlu0
        %v494 = vpop.trf.xlu0
        %v495 = vpop.trf.xlu0
        %v496 = vpop.trf.xlu0
        %v497 = vpop.trf.xlu0
        %v498 = vpop.trf.xlu0
        %v499 = vpop.trf.xlu0
        %v500 = vpop.trf.xlu0
        %v501 = vpop.trf.xlu0
        %v502 = vpop.trf.xlu0
        %v503 = vpop.trf.xlu0
        %v504 = vpop.trf.xlu0
        %v505 = vpop.trf.xlu0
        %v506 = vpop.trf.xlu0
        %507 = vxpose.xlu0.b32.start [1/16] %v454, 128
        %508 = vxpose.xlu0.b32.cont [2/16] %v456, 128
        %509 = vxpose.xlu0.b32.cont [3/16] %v458, 128
        %510 = vxpose.xlu0.b32.cont [4/16] %v460, 128
        %511 = vxpose.xlu0.b32.cont [5/16] 0.0, 128
        %512 = vxpose.xlu0.b32.cont [6/16] 0.0, 128
        %513 = vxpose.xlu0.b32.cont [7/16] 0.0, 128
        %514 = vxpose.xlu0.b32.cont [8/16] 0.0, 128
        %515 = vxpose.xlu0.b32.cont [9/16] 0.0, 128
        %516 = vxpose.xlu0.b32.cont [10/16] 0.0, 128
        %517 = vxpose.xlu0.b32.cont [11/16] 0.0, 128
        %518 = vxpose.xlu0.b32.cont [12/16] 0.0, 128
        %519 = vxpose.xlu0.b32.cont [13/16] 0.0, 128
        %520 = vxpose.xlu0.b32.cont [14/16] 0.0, 128
        %521 = vxpose.xlu0.b32.cont [15/16] 0.0, 128
        %522 = vxpose.xlu0.b32.end [16/16] 0.0, 128
        %v523 = vpop.trf.xlu0
        %v524 = vpop.trf.xlu0
        %v525 = vpop.trf.xlu0
        %v526 = vpop.trf.xlu0
        %v527 = vpop.trf.xlu0
        %v528 = vpop.trf.xlu0
        %v529 = vpop.trf.xlu0
        %v530 = vpop.trf.xlu0
        %v531 = vpop.trf.xlu0
        %v532 = vpop.trf.xlu0
        %v533 = vpop.trf.xlu0
        %v534 = vpop.trf.xlu0
        %v535 = vpop.trf.xlu0
        %v536 = vpop.trf.xlu0
        %v537 = vpop.trf.xlu0
        %v538 = vpop.trf.xlu0
        %vm539 = vcmask 261120
        %v541 = vsel %vm539, %v491, 0
        %v544 = vsel %vm539, %v492, 0
        %v547 = vsel %vm539, %v493, 0
        %v550 = vsel %vm539, %v494, 0
        %v553 = vsel %vm539, %v495, 0
        %v556 = vsel %vm539, %v496, 0
        %v559 = vsel %vm539, %v497, 0
        %v562 = vsel %vm539, %v498, 0
        %v565 = vsel %vm539, %v499, 0
        %v568 = vsel %vm539, %v500, 0
        %v571 = vsel %vm539, %v501, 0
        %v574 = vsel %vm539, %v502, 0
        %v577 = vsel %vm539, %v503, 0
        %v580 = vsel %vm539, %v504, 0
        %v583 = vsel %vm539, %v505, 0
        %v586 = vsel %vm539, %v506, 0
        %v589 = vsel %vm539, %v523, 0
        %v592 = vsel %vm539, %v524, 0
        %v595 = vsel %vm539, %v525, 0
        %v598 = vsel %vm539, %v526, 0
        %v601 = vsel %vm539, %v527, 0
        %v604 = vsel %vm539, %v528, 0
        %v607 = vsel %vm539, %v529, 0
        %v610 = vsel %vm539, %v530, 0
        %v613 = vsel %vm539, %v531, 0
        %v616 = vsel %vm539, %v532, 0
        %v619 = vsel %vm539, %v533, 0
        %v622 = vsel %vm539, %v534, 0
        %v625 = vsel %vm539, %v535, 0
        %v628 = vsel %vm539, %v536, 0
        %v631 = vsel %vm539, %v537, 0
        %v634 = vsel %vm539, %v538, 0
        %636 = vmatpush.msra.mxu0 0.0
        %637 = vmatpush.msra.mxu0 0.0
        %638 = vmatpush.msra.mxu0 0.0
        %639 = vmatpush.msra.mxu0 0.0
        %640 = vmatpush.msra.mxu0 0.0
        %641 = vmatpush.msra.mxu0 0.0
        %642 = vmatpush.msra.mxu0 0.0
        %643 = vmatpush.msra.mxu0 0.0
        %644 = vmatpush.msra.mxu0 0.0
        %645 = vmatpush.msra.mxu0 0.0
        %646 = vmatpush.msra.mxu0 0.0
        %647 = vmatpush.msra.mxu0 0.0
        %648 = vmatpush.msra.mxu0 %v467
        %649 = vmatpush.msra.mxu0 %v465
        %650 = vmatpush.msra.mxu0 %v463
        %651 = vmatpush.msra.mxu0 %v461
        %652 = vmatmul.f32.gmra.mxu0 %v541
        %v653 = vpop.f32.mrf.mxu0
        %v654 = vadd.f32 %v471, %v653
        %655 = vmatmul.f32.gmra.mxu0 %v544
        %v656 = vpop.f32.mrf.mxu0
        %v657 = vadd.f32 %v471, %v656
        %658 = vmatmul.f32.gmra.mxu0 %v547
        %v659 = vpop.f32.mrf.mxu0
        %v660 = vadd.f32 %v471, %v659
        %661 = vmatmul.f32.gmra.mxu0 %v550
        %v662 = vpop.f32.mrf.mxu0
        %v663 = vadd.f32 %v471, %v662
        %664 = vmatmul.f32.gmra.mxu0 %v553
        %v665 = vpop.f32.mrf.mxu0
        %v666 = vadd.f32 %v471, %v665
        %667 = vmatmul.f32.gmra.mxu0 %v556
        %v668 = vpop.f32.mrf.mxu0
        %v669 = vadd.f32 %v471, %v668
        %670 = vmatmul.f32.gmra.mxu0 %v559
        %v671 = vpop.f32.mrf.mxu0
        %v672 = vadd.f32 %v471, %v671
        %673 = vmatmul.f32.gmra.mxu0 %v562
        %v674 = vpop.f32.mrf.mxu0
        %v675 = vadd.f32 %v471, %v674
        %676 = vmatmul.f32.gmra.mxu0 %v565
        %v677 = vpop.f32.mrf.mxu0
        %v678 = vadd.f32 %v471, %v677
        %679 = vmatmul.f32.gmra.mxu0 %v568
        %v680 = vpop.f32.mrf.mxu0
        %v681 = vadd.f32 %v471, %v680
        %682 = vmatmul.f32.gmra.mxu0 %v571
        %v683 = vpop.f32.mrf.mxu0
        %v684 = vadd.f32 %v471, %v683
        %685 = vmatmul.f32.gmra.mxu0 %v574
        %v686 = vpop.f32.mrf.mxu0
        %v687 = vadd.f32 %v471, %v686
        %688 = vmatmul.f32.gmra.mxu0 %v577
        %v689 = vpop.f32.mrf.mxu0
        %v690 = vadd.f32 %v471, %v689
        %691 = vmatmul.f32.gmra.mxu0 %v580
        %v692 = vpop.f32.mrf.mxu0
        %v693 = vadd.f32 %v471, %v692
        %694 = vmatmul.f32.gmra.mxu0 %v583
        %v695 = vpop.f32.mrf.mxu0
        %v696 = vadd.f32 %v471, %v695
        %697 = vmatmul.f32.gmra.mxu0 %v586
        %v698 = vpop.f32.mrf.mxu0
        %v699 = vadd.f32 %v471, %v698
        %700 = vmatmul.f32.gmra.mxu0 %v589
        %v701 = vpop.f32.mrf.mxu0
        %v702 = vadd.f32 %v471, %v701
        %703 = vmatmul.f32.gmra.mxu0 %v592
        %v704 = vpop.f32.mrf.mxu0
        %v705 = vadd.f32 %v471, %v704
        %706 = vmatmul.f32.gmra.mxu0 %v595
        %v707 = vpop.f32.mrf.mxu0
        %v708 = vadd.f32 %v471, %v707
        %709 = vmatmul.f32.gmra.mxu0 %v598
        %v710 = vpop.f32.mrf.mxu0
        %v711 = vadd.f32 %v471, %v710
        %712 = vmatmul.f32.gmra.mxu0 %v601
        %v713 = vpop.f32.mrf.mxu0
        %v714 = vadd.f32 %v471, %v713
        %715 = vmatmul.f32.gmra.mxu0 %v604
        %v716 = vpop.f32.mrf.mxu0
        %v717 = vadd.f32 %v471, %v716
        %718 = vmatmul.f32.gmra.mxu0 %v607
        %v719 = vpop.f32.mrf.mxu0
        %v720 = vadd.f32 %v471, %v719
        %721 = vmatmul.f32.gmra.mxu0 %v610
        %v722 = vpop.f32.mrf.mxu0
        %v723 = vadd.f32 %v471, %v722
        %724 = vmatmul.f32.gmra.mxu0 %v613
        %v725 = vpop.f32.mrf.mxu0
        %v726 = vadd.f32 %v471, %v725
        %727 = vmatmul.f32.gmra.mxu0 %v616
        %v728 = vpop.f32.mrf.mxu0
        %v729 = vadd.f32 %v471, %v728
        %730 = vmatmul.f32.gmra.mxu0 %v619
        %v731 = vpop.f32.mrf.mxu0
        %v732 = vadd.f32 %v471, %v731
        %733 = vmatmul.f32.gmra.mxu0 %v622
        %v734 = vpop.f32.mrf.mxu0
        %v735 = vadd.f32 %v471, %v734
        %736 = vmatmul.f32.gmra.mxu0 %v625
        %v737 = vpop.f32.mrf.mxu0
        %v738 = vadd.f32 %v471, %v737
        %739 = vmatmul.f32.gmra.mxu0 %v628
        %v740 = vpop.f32.mrf.mxu0
        %v741 = vadd.f32 %v471, %v740
        %742 = vmatmul.f32.gmra.mxu0 %v631
        %v743 = vpop.f32.mrf.mxu0
        %v744 = vadd.f32 %v471, %v743
        %745 = vmatmul.f32.gmra.mxu0 %v634
        %v746 = vpop.f32.mrf.mxu0
        %v747 = vadd.f32 %v471, %v746
        %748 = vdwg.mxu0
        %749 = vmatpush.msra.mxu0 0.0
        %750 = vmatpush.msra.mxu0 0.0
        %751 = vmatpush.msra.mxu0 0.0
        %752 = vmatpush.msra.mxu0 0.0
        %753 = vmatpush.msra.mxu0 0.0
        %754 = vmatpush.msra.mxu0 0.0
        %755 = vmatpush.msra.mxu0 0.0
        %756 = vmatpush.msra.mxu0 0.0
        %757 = vmatpush.msra.mxu0 0.0
        %758 = vmatpush.msra.mxu0 0.0
        %759 = vmatpush.msra.mxu0 0.0
        %760 = vmatpush.msra.mxu0 0.0
        %761 = vmatpush.msra.mxu0 %v468
        %762 = vmatpush.msra.mxu0 %v466
        %763 = vmatpush.msra.mxu0 %v464
        %764 = vmatpush.msra.mxu0 %v462
        %765 = vmatmul.f32.gmra.mxu0 %v541
        %v766 = vpop.f32.mrf.mxu0
        %v767 = vadd.f32 %v472, %v766
        %768 = vmatmul.f32.gmra.mxu0 %v544
        %v769 = vpop.f32.mrf.mxu0
        %v770 = vadd.f32 %v472, %v769
        %771 = vmatmul.f32.gmra.mxu0 %v547
        %v772 = vpop.f32.mrf.mxu0
        %v773 = vadd.f32 %v472, %v772
        %774 = vmatmul.f32.gmra.mxu0 %v550
        %v775 = vpop.f32.mrf.mxu0
        %v776 = vadd.f32 %v472, %v775
        %777 = vmatmul.f32.gmra.mxu0 %v553
        %v778 = vpop.f32.mrf.mxu0
        %v779 = vadd.f32 %v472, %v778
        %780 = vmatmul.f32.gmra.mxu0 %v556
        %v781 = vpop.f32.mrf.mxu0
        %v782 = vadd.f32 %v472, %v781
        %783 = vmatmul.f32.gmra.mxu0 %v559
        %v784 = vpop.f32.mrf.mxu0
        %v785 = vadd.f32 %v472, %v784
        %786 = vmatmul.f32.gmra.mxu0 %v562
        %v787 = vpop.f32.mrf.mxu0
        %v788 = vadd.f32 %v472, %v787
        %789 = vmatmul.f32.gmra.mxu0 %v565
        %v790 = vpop.f32.mrf.mxu0
        %v791 = vadd.f32 %v472, %v790
        %792 = vmatmul.f32.gmra.mxu0 %v568
        %v793 = vpop.f32.mrf.mxu0
        %v794 = vadd.f32 %v472, %v793
        %795 = vmatmul.f32.gmra.mxu0 %v571
        %v796 = vpop.f32.mrf.mxu0
        %v797 = vadd.f32 %v472, %v796
        %798 = vmatmul.f32.gmra.mxu0 %v574
        %v799 = vpop.f32.mrf.mxu0
        %v800 = vadd.f32 %v472, %v799
        %801 = vmatmul.f32.gmra.mxu0 %v577
        %v802 = vpop.f32.mrf.mxu0
        %v803 = vadd.f32 %v472, %v802
        %804 = vmatmul.f32.gmra.mxu0 %v580
        %v805 = vpop.f32.mrf.mxu0
        %v806 = vadd.f32 %v472, %v805
        %807 = vmatmul.f32.gmra.mxu0 %v583
        %v808 = vpop.f32.mrf.mxu0
        %v809 = vadd.f32 %v472, %v808
        %810 = vmatmul.f32.gmra.mxu0 %v586
        %v811 = vpop.f32.mrf.mxu0
        %v812 = vadd.f32 %v472, %v811
        %813 = vmatmul.f32.gmra.mxu0 %v589
        %v814 = vpop.f32.mrf.mxu0
        %v815 = vadd.f32 %v472, %v814
        %816 = vmatmul.f32.gmra.mxu0 %v592
        %v817 = vpop.f32.mrf.mxu0
        %v818 = vadd.f32 %v472, %v817
        %819 = vmatmul.f32.gmra.mxu0 %v595
        %v820 = vpop.f32.mrf.mxu0
        %v821 = vadd.f32 %v472, %v820
        %822 = vmatmul.f32.gmra.mxu0 %v598
        %v823 = vpop.f32.mrf.mxu0
        %v824 = vadd.f32 %v472, %v823
        %825 = vmatmul.f32.gmra.mxu0 %v601
        %v826 = vpop.f32.mrf.mxu0
        %v827 = vadd.f32 %v472, %v826
        %828 = vmatmul.f32.gmra.mxu0 %v604
        %v829 = vpop.f32.mrf.mxu0
        %v830 = vadd.f32 %v472, %v829
        %831 = vmatmul.f32.gmra.mxu0 %v607
        %v832 = vpop.f32.mrf.mxu0
        %v833 = vadd.f32 %v472, %v832
        %834 = vmatmul.f32.gmra.mxu0 %v610
        %v835 = vpop.f32.mrf.mxu0
        %v836 = vadd.f32 %v472, %v835
        %837 = vmatmul.f32.gmra.mxu0 %v613
        %v838 = vpop.f32.mrf.mxu0
        %v839 = vadd.f32 %v472, %v838
        %840 = vmatmul.f32.gmra.mxu0 %v616
        %v841 = vpop.f32.mrf.mxu0
        %v842 = vadd.f32 %v472, %v841
        %843 = vmatmul.f32.gmra.mxu0 %v619
        %v844 = vpop.f32.mrf.mxu0
        %v845 = vadd.f32 %v472, %v844
        %846 = vmatmul.f32.gmra.mxu0 %v622
        %v847 = vpop.f32.mrf.mxu0
        %v848 = vadd.f32 %v472, %v847
        %849 = vmatmul.f32.gmra.mxu0 %v625
        %v850 = vpop.f32.mrf.mxu0
        %v851 = vadd.f32 %v472, %v850
        %852 = vmatmul.f32.gmra.mxu0 %v628
        %v853 = vpop.f32.mrf.mxu0
        %v854 = vadd.f32 %v472, %v853
        %855 = vmatmul.f32.gmra.mxu0 %v631
        %v856 = vpop.f32.mrf.mxu0
        %v857 = vadd.f32 %v472, %v856
        %858 = vmatmul.f32.gmra.mxu0 %v634
        %v859 = vpop.f32.mrf.mxu0
        %v860 = vadd.f32 %v472, %v859
        %861 = vdwg.mxu0
        %vm862 = vcmask 457728
        %863 = vst.msk [vmem:[%s411] sm:$0xff] %vm862, %v654
        %864 = vst.msk [vmem:[%s411 + $0x8] sm:$0xff] %vm862, %v657
        %865 = vst.msk [vmem:[%s411 + $0x10] sm:$0xff] %vm862, %v660
        %866 = vst.msk [vmem:[%s411 + $0x18] sm:$0xff] %vm862, %v663
        %867 = vst.msk [vmem:[%s411 + $0x20] sm:$0xff] %vm862, %v666
        %868 = vst.msk [vmem:[%s411 + $0x28] sm:$0xff] %vm862, %v669
        %869 = vst.msk [vmem:[%s411 + $0x30] sm:$0xff] %vm862, %v672
        %870 = vst.msk [vmem:[%s411 + $0x38] sm:$0xff] %vm862, %v675
        %871 = vst.msk [vmem:[%s411 + $0x40] sm:$0xff] %vm862, %v678
        %872 = vst.msk [vmem:[%s411 + $0x48] sm:$0xff] %vm862, %v681
        %873 = vst.msk [vmem:[%s411 + $0x50] sm:$0xff] %vm862, %v684
        %874 = vst.msk [vmem:[%s411 + $0x58] sm:$0xff] %vm862, %v687
        %875 = vst.msk [vmem:[%s411 + $0x60] sm:$0xff] %vm862, %v690
        %876 = vst.msk [vmem:[%s411 + $0x68] sm:$0xff] %vm862, %v693
        %877 = vst.msk [vmem:[%s411 + $0x70] sm:$0xff] %vm862, %v696
        %878 = vst.msk [vmem:[%s411 + $0x78] sm:$0xff] %vm862, %v699
        %879 = vst.msk [vmem:[%s411 + $0x80] sm:$0xff] %vm862, %v702
        %880 = vst.msk [vmem:[%s411 + $0x88] sm:$0xff] %vm862, %v705
        %881 = vst.msk [vmem:[%s411 + $0x90] sm:$0xff] %vm862, %v708
        %882 = vst.msk [vmem:[%s411 + $0x98] sm:$0xff] %vm862, %v711
        %883 = vst.msk [vmem:[%s411 + $0xa0] sm:$0xff] %vm862, %v714
        %884 = vst.msk [vmem:[%s411 + $0xa8] sm:$0xff] %vm862, %v717
        %885 = vst.msk [vmem:[%s411 + $0xb0] sm:$0xff] %vm862, %v720
        %886 = vst.msk [vmem:[%s411 + $0xb8] sm:$0xff] %vm862, %v723
        %887 = vst.msk [vmem:[%s411 + $0xc0] sm:$0xff] %vm862, %v726
        %888 = vst.msk [vmem:[%s411 + $0xc8] sm:$0xff] %vm862, %v729
        %889 = vst.msk [vmem:[%s411 + $0xd0] sm:$0xff] %vm862, %v732
        %890 = vst.msk [vmem:[%s411 + $0xd8] sm:$0xff] %vm862, %v735
        %891 = vst.msk [vmem:[%s411 + $0xe0] sm:$0xff] %vm862, %v738
        %892 = vst.msk [vmem:[%s411 + $0xe8] sm:$0xff] %vm862, %v741
        %893 = vst.msk [vmem:[%s411 + $0xf0] sm:$0xff] %vm862, %v744
        %894 = vst.msk [vmem:[%s411 + $0xf8] sm:$0xff] %vm862, %v747
        %927 = vrot.lane.b32.xlu0 %v654, 72
        %v928 = vpop.permute.xlu0 %927
        %929 = vrot.lane.b32.xlu0 %v657, 72
        %v930 = vpop.permute.xlu0 %929
        %931 = vrot.lane.b32.xlu0 %v660, 72
        %v932 = vpop.permute.xlu0 %931
        %933 = vrot.lane.b32.xlu0 %v663, 72
        %v934 = vpop.permute.xlu0 %933
        %935 = vrot.lane.b32.xlu0 %v666, 72
        %v936 = vpop.permute.xlu0 %935
        %937 = vrot.lane.b32.xlu0 %v669, 72
        %v938 = vpop.permute.xlu0 %937
        %939 = vrot.lane.b32.xlu0 %v672, 72
        %v940 = vpop.permute.xlu0 %939
        %941 = vrot.lane.b32.xlu0 %v675, 72
        %v942 = vpop.permute.xlu0 %941
        %943 = vrot.lane.b32.xlu0 %v678, 72
        %v944 = vpop.permute.xlu0 %943
        %945 = vrot.lane.b32.xlu0 %v681, 72
        %v946 = vpop.permute.xlu0 %945
        %947 = vrot.lane.b32.xlu0 %v684, 72
        %v948 = vpop.permute.xlu0 %947
        %949 = vrot.lane.b32.xlu0 %v687, 72
        %v950 = vpop.permute.xlu0 %949
        %951 = vrot.lane.b32.xlu0 %v690, 72
        %v952 = vpop.permute.xlu0 %951
        %953 = vrot.lane.b32.xlu0 %v693, 72
        %v954 = vpop.permute.xlu0 %953
        %955 = vrot.lane.b32.xlu0 %v696, 72
        %v956 = vpop.permute.xlu0 %955
        %957 = vrot.lane.b32.xlu0 %v699, 72
        %v958 = vpop.permute.xlu0 %957
        %959 = vrot.lane.b32.xlu0 %v702, 72
        %v960 = vpop.permute.xlu0 %959
        %961 = vrot.lane.b32.xlu0 %v705, 72
        %v962 = vpop.permute.xlu0 %961
        %963 = vrot.lane.b32.xlu0 %v708, 72
        %v964 = vpop.permute.xlu0 %963
        %965 = vrot.lane.b32.xlu0 %v711, 72
        %v966 = vpop.permute.xlu0 %965
        %967 = vrot.lane.b32.xlu0 %v714, 72
        %v968 = vpop.permute.xlu0 %967
        %969 = vrot.lane.b32.xlu0 %v717, 72
        %v970 = vpop.permute.xlu0 %969
        %971 = vrot.lane.b32.xlu0 %v720, 72
        %v972 = vpop.permute.xlu0 %971
        %973 = vrot.lane.b32.xlu0 %v723, 72
        %v974 = vpop.permute.xlu0 %973
        %975 = vrot.lane.b32.xlu0 %v726, 72
        %v976 = vpop.permute.xlu0 %975
        %977 = vrot.lane.b32.xlu0 %v729, 72
        %v978 = vpop.permute.xlu0 %977
        %979 = vrot.lane.b32.xlu0 %v732, 72
        %v980 = vpop.permute.xlu0 %979
        %981 = vrot.lane.b32.xlu0 %v735, 72
        %v982 = vpop.permute.xlu0 %981
        %983 = vrot.lane.b32.xlu0 %v738, 72
        %v984 = vpop.permute.xlu0 %983
        %985 = vrot.lane.b32.xlu0 %v741, 72
        %v986 = vpop.permute.xlu0 %985
        %987 = vrot.lane.b32.xlu0 %v744, 72
        %v988 = vpop.permute.xlu0 %987
        %989 = vrot.lane.b32.xlu0 %v747, 72
        %v990 = vpop.permute.xlu0 %989
        %1023 = vst.msk [vmem:[%s421] sm:$0xff] %vm862, %v928
        %1024 = vst.msk [vmem:[%s421 + $0x8] sm:$0xff] %vm862, %v930
        %1025 = vst.msk [vmem:[%s421 + $0x10] sm:$0xff] %vm862, %v932
        %1026 = vst.msk [vmem:[%s421 + $0x18] sm:$0xff] %vm862, %v934
        %1027 = vst.msk [vmem:[%s421 + $0x20] sm:$0xff] %vm862, %v936
        %1028 = vst.msk [vmem:[%s421 + $0x28] sm:$0xff] %vm862, %v938
        %1029 = vst.msk [vmem:[%s421 + $0x30] sm:$0xff] %vm862, %v940
        %1030 = vst.msk [vmem:[%s421 + $0x38] sm:$0xff] %vm862, %v942
        %1031 = vst.msk [vmem:[%s421 + $0x40] sm:$0xff] %vm862, %v944
        %1032 = vst.msk [vmem:[%s421 + $0x48] sm:$0xff] %vm862, %v946
        %1033 = vst.msk [vmem:[%s421 + $0x50] sm:$0xff] %vm862, %v948
        %1034 = vst.msk [vmem:[%s421 + $0x58] sm:$0xff] %vm862, %v950
        %1035 = vst.msk [vmem:[%s421 + $0x60] sm:$0xff] %vm862, %v952
        %1036 = vst.msk [vmem:[%s421 + $0x68] sm:$0xff] %vm862, %v954
        %1037 = vst.msk [vmem:[%s421 + $0x70] sm:$0xff] %vm862, %v956
        %1038 = vst.msk [vmem:[%s421 + $0x78] sm:$0xff] %vm862, %v958
        %1039 = vst.msk [vmem:[%s421 + $0x80] sm:$0xff] %vm862, %v960
        %1040 = vst.msk [vmem:[%s421 + $0x88] sm:$0xff] %vm862, %v962
        %1041 = vst.msk [vmem:[%s421 + $0x90] sm:$0xff] %vm862, %v964
        %1042 = vst.msk [vmem:[%s421 + $0x98] sm:$0xff] %vm862, %v966
        %1043 = vst.msk [vmem:[%s421 + $0xa0] sm:$0xff] %vm862, %v968
        %1044 = vst.msk [vmem:[%s421 + $0xa8] sm:$0xff] %vm862, %v970
        %1045 = vst.msk [vmem:[%s421 + $0xb0] sm:$0xff] %vm862, %v972
        %1046 = vst.msk [vmem:[%s421 + $0xb8] sm:$0xff] %vm862, %v974
        %1047 = vst.msk [vmem:[%s421 + $0xc0] sm:$0xff] %vm862, %v976
        %1048 = vst.msk [vmem:[%s421 + $0xc8] sm:$0xff] %vm862, %v978
        %1049 = vst.msk [vmem:[%s421 + $0xd0] sm:$0xff] %vm862, %v980
        %1050 = vst.msk [vmem:[%s421 + $0xd8] sm:$0xff] %vm862, %v982
        %1051 = vst.msk [vmem:[%s421 + $0xe0] sm:$0xff] %vm862, %v984
        %1052 = vst.msk [vmem:[%s421 + $0xe8] sm:$0xff] %vm862, %v986
        %1053 = vst.msk [vmem:[%s421 + $0xf0] sm:$0xff] %vm862, %v988
        %1054 = vst.msk [vmem:[%s421 + $0xf8] sm:$0xff] %vm862, %v990
        %1055 = vrot.lane.b32.xlu0 %v654, 16
        %v1056 = vpop.permute.xlu0 %1055
        %1057 = vrot.lane.b32.xlu0 %v657, 16
        %v1058 = vpop.permute.xlu0 %1057
        %1059 = vrot.lane.b32.xlu0 %v660, 16
        %v1060 = vpop.permute.xlu0 %1059
        %1061 = vrot.lane.b32.xlu0 %v663, 16
        %v1062 = vpop.permute.xlu0 %1061
        %1063 = vrot.lane.b32.xlu0 %v666, 16
        %v1064 = vpop.permute.xlu0 %1063
        %1065 = vrot.lane.b32.xlu0 %v669, 16
        %v1066 = vpop.permute.xlu0 %1065
        %1067 = vrot.lane.b32.xlu0 %v672, 16
        %v1068 = vpop.permute.xlu0 %1067
        %1069 = vrot.lane.b32.xlu0 %v675, 16
        %v1070 = vpop.permute.xlu0 %1069
        %1071 = vrot.lane.b32.xlu0 %v678, 16
        %v1072 = vpop.permute.xlu0 %1071
        %1073 = vrot.lane.b32.xlu0 %v681, 16
        %v1074 = vpop.permute.xlu0 %1073
        %1075 = vrot.lane.b32.xlu0 %v684, 16
        %v1076 = vpop.permute.xlu0 %1075
        %1077 = vrot.lane.b32.xlu0 %v687, 16
        %v1078 = vpop.permute.xlu0 %1077
        %1079 = vrot.lane.b32.xlu0 %v690, 16
        %v1080 = vpop.permute.xlu0 %1079
        %1081 = vrot.lane.b32.xlu0 %v693, 16
        %v1082 = vpop.permute.xlu0 %1081
        %1083 = vrot.lane.b32.xlu0 %v696, 16
        %v1084 = vpop.permute.xlu0 %1083
        %1085 = vrot.lane.b32.xlu0 %v699, 16
        %v1086 = vpop.permute.xlu0 %1085
        %1087 = vrot.lane.b32.xlu0 %v702, 16
        %v1088 = vpop.permute.xlu0 %1087
        %1089 = vrot.lane.b32.xlu0 %v705, 16
        %v1090 = vpop.permute.xlu0 %1089
        %1091 = vrot.lane.b32.xlu0 %v708, 16
        %v1092 = vpop.permute.xlu0 %1091
        %1093 = vrot.lane.b32.xlu0 %v711, 16
        %v1094 = vpop.permute.xlu0 %1093
        %1095 = vrot.lane.b32.xlu0 %v714, 16
        %v1096 = vpop.permute.xlu0 %1095
        %1097 = vrot.lane.b32.xlu0 %v717, 16
        %v1098 = vpop.permute.xlu0 %1097
        %1099 = vrot.lane.b32.xlu0 %v720, 16
        %v1100 = vpop.permute.xlu0 %1099
        %1101 = vrot.lane.b32.xlu0 %v723, 16
        %v1102 = vpop.permute.xlu0 %1101
        %1103 = vrot.lane.b32.xlu0 %v726, 16
        %v1104 = vpop.permute.xlu0 %1103
        %1105 = vrot.lane.b32.xlu0 %v729, 16
        %v1106 = vpop.permute.xlu0 %1105
        %1107 = vrot.lane.b32.xlu0 %v732, 16
        %v1108 = vpop.permute.xlu0 %1107
        %1109 = vrot.lane.b32.xlu0 %v735, 16
        %v1110 = vpop.permute.xlu0 %1109
        %1111 = vrot.lane.b32.xlu0 %v738, 16
        %v1112 = vpop.permute.xlu0 %1111
        %1113 = vrot.lane.b32.xlu0 %v741, 16
        %v1114 = vpop.permute.xlu0 %1113
        %1115 = vrot.lane.b32.xlu0 %v744, 16
        %v1116 = vpop.permute.xlu0 %1115
        %1117 = vrot.lane.b32.xlu0 %v747, 16
        %v1118 = vpop.permute.xlu0 %1117
        %vm1151 = vcmask 64512
        %1152 = vst.msk [vmem:[%s431] sm:$0xff] %vm1151, %v1056
        %1153 = vst.msk [vmem:[%s431 + $0x8] sm:$0xff] %vm1151, %v1058
        %1154 = vst.msk [vmem:[%s431 + $0x10] sm:$0xff] %vm1151, %v1060
        %1155 = vst.msk [vmem:[%s431 + $0x18] sm:$0xff] %vm1151, %v1062
        %1156 = vst.msk [vmem:[%s431 + $0x20] sm:$0xff] %vm1151, %v1064
        %1157 = vst.msk [vmem:[%s431 + $0x28] sm:$0xff] %vm1151, %v1066
        %1158 = vst.msk [vmem:[%s431 + $0x30] sm:$0xff] %vm1151, %v1068
        %1159 = vst.msk [vmem:[%s431 + $0x38] sm:$0xff] %vm1151, %v1070
        %1160 = vst.msk [vmem:[%s431 + $0x40] sm:$0xff] %vm1151, %v1072
        %1161 = vst.msk [vmem:[%s431 + $0x48] sm:$0xff] %vm1151, %v1074
        %1162 = vst.msk [vmem:[%s431 + $0x50] sm:$0xff] %vm1151, %v1076
        %1163 = vst.msk [vmem:[%s431 + $0x58] sm:$0xff] %vm1151, %v1078
        %1164 = vst.msk [vmem:[%s431 + $0x60] sm:$0xff] %vm1151, %v1080
        %1165 = vst.msk [vmem:[%s431 + $0x68] sm:$0xff] %vm1151, %v1082
        %1166 = vst.msk [vmem:[%s431 + $0x70] sm:$0xff] %vm1151, %v1084
        %1167 = vst.msk [vmem:[%s431 + $0x78] sm:$0xff] %vm1151, %v1086
        %1168 = vst.msk [vmem:[%s431 + $0x80] sm:$0xff] %vm1151, %v1088
        %1169 = vst.msk [vmem:[%s431 + $0x88] sm:$0xff] %vm1151, %v1090
        %1170 = vst.msk [vmem:[%s431 + $0x90] sm:$0xff] %vm1151, %v1092
        %1171 = vst.msk [vmem:[%s431 + $0x98] sm:$0xff] %vm1151, %v1094
        %1172 = vst.msk [vmem:[%s431 + $0xa0] sm:$0xff] %vm1151, %v1096
        %1173 = vst.msk [vmem:[%s431 + $0xa8] sm:$0xff] %vm1151, %v1098
        %1174 = vst.msk [vmem:[%s431 + $0xb0] sm:$0xff] %vm1151, %v1100
        %1175 = vst.msk [vmem:[%s431 + $0xb8] sm:$0xff] %vm1151, %v1102
        %1176 = vst.msk [vmem:[%s431 + $0xc0] sm:$0xff] %vm1151, %v1104
        %1177 = vst.msk [vmem:[%s431 + $0xc8] sm:$0xff] %vm1151, %v1106
        %1178 = vst.msk [vmem:[%s431 + $0xd0] sm:$0xff] %vm1151, %v1108
        %1179 = vst.msk [vmem:[%s431 + $0xd8] sm:$0xff] %vm1151, %v1110
        %1180 = vst.msk [vmem:[%s431 + $0xe0] sm:$0xff] %vm1151, %v1112
        %1181 = vst.msk [vmem:[%s431 + $0xe8] sm:$0xff] %vm1151, %v1114
        %1182 = vst.msk [vmem:[%s431 + $0xf0] sm:$0xff] %vm1151, %v1116
        %1183 = vst.msk [vmem:[%s431 + $0xf8] sm:$0xff] %vm1151, %v1118
        %1184 = vrot.lane.b32.xlu0 %v654, 8
        %v1185 = vpop.permute.xlu0 %1184
        %1186 = vrot.lane.b32.xlu0 %v657, 8
        %v1187 = vpop.permute.xlu0 %1186
        %1188 = vrot.lane.b32.xlu0 %v660, 8
        %v1189 = vpop.permute.xlu0 %1188
        %1190 = vrot.lane.b32.xlu0 %v663, 8
        %v1191 = vpop.permute.xlu0 %1190
        %1192 = vrot.lane.b32.xlu0 %v666, 8
        %v1193 = vpop.permute.xlu0 %1192
        %1194 = vrot.lane.b32.xlu0 %v669, 8
        %v1195 = vpop.permute.xlu0 %1194
        %1196 = vrot.lane.b32.xlu0 %v672, 8
        %v1197 = vpop.permute.xlu0 %1196
        %1198 = vrot.lane.b32.xlu0 %v675, 8
        %v1199 = vpop.permute.xlu0 %1198
        %1200 = vrot.lane.b32.xlu0 %v678, 8
        %v1201 = vpop.permute.xlu0 %1200
        %1202 = vrot.lane.b32.xlu0 %v681, 8
        %v1203 = vpop.permute.xlu0 %1202
        %1204 = vrot.lane.b32.xlu0 %v684, 8
        %v1205 = vpop.permute.xlu0 %1204
        %1206 = vrot.lane.b32.xlu0 %v687, 8
        %v1207 = vpop.permute.xlu0 %1206
        %1208 = vrot.lane.b32.xlu0 %v690, 8
        %v1209 = vpop.permute.xlu0 %1208
        %1210 = vrot.lane.b32.xlu0 %v693, 8
        %v1211 = vpop.permute.xlu0 %1210
        %1212 = vrot.lane.b32.xlu0 %v696, 8
        %v1213 = vpop.permute.xlu0 %1212
        %1214 = vrot.lane.b32.xlu0 %v699, 8
        %v1215 = vpop.permute.xlu0 %1214
        %1216 = vrot.lane.b32.xlu0 %v702, 8
        %v1217 = vpop.permute.xlu0 %1216
        %1218 = vrot.lane.b32.xlu0 %v705, 8
        %v1219 = vpop.permute.xlu0 %1218
        %1220 = vrot.lane.b32.xlu0 %v708, 8
        %v1221 = vpop.permute.xlu0 %1220
        %1222 = vrot.lane.b32.xlu0 %v711, 8
        %v1223 = vpop.permute.xlu0 %1222
        %1224 = vrot.lane.b32.xlu0 %v714, 8
        %v1225 = vpop.permute.xlu0 %1224
        %1226 = vrot.lane.b32.xlu0 %v717, 8
        %v1227 = vpop.permute.xlu0 %1226
        %1228 = vrot.lane.b32.xlu0 %v720, 8
        %v1229 = vpop.permute.xlu0 %1228
        %1230 = vrot.lane.b32.xlu0 %v723, 8
        %v1231 = vpop.permute.xlu0 %1230
        %1232 = vrot.lane.b32.xlu0 %v726, 8
        %v1233 = vpop.permute.xlu0 %1232
        %1234 = vrot.lane.b32.xlu0 %v729, 8
        %v1235 = vpop.permute.xlu0 %1234
        %1236 = vrot.lane.b32.xlu0 %v732, 8
        %v1237 = vpop.permute.xlu0 %1236
        %1238 = vrot.lane.b32.xlu0 %v735, 8
        %v1239 = vpop.permute.xlu0 %1238
        %1240 = vrot.lane.b32.xlu0 %v738, 8
        %v1241 = vpop.permute.xlu0 %1240
        %1242 = vrot.lane.b32.xlu0 %v741, 8
        %v1243 = vpop.permute.xlu0 %1242
        %1244 = vrot.lane.b32.xlu0 %v744, 8
        %v1245 = vpop.permute.xlu0 %1244
        %1246 = vrot.lane.b32.xlu0 %v747, 8
        %v1247 = vpop.permute.xlu0 %1246
        %1280 = vst.msk [vmem:[%s441] sm:$0xff] %vm1151, %v1185
        %1281 = vst.msk [vmem:[%s441 + $0x8] sm:$0xff] %vm1151, %v1187
        %1282 = vst.msk [vmem:[%s441 + $0x10] sm:$0xff] %vm1151, %v1189
        %1283 = vst.msk [vmem:[%s441 + $0x18] sm:$0xff] %vm1151, %v1191
        %1284 = vst.msk [vmem:[%s441 + $0x20] sm:$0xff] %vm1151, %v1193
        %1285 = vst.msk [vmem:[%s441 + $0x28] sm:$0xff] %vm1151, %v1195
        %1286 = vst.msk [vmem:[%s441 + $0x30] sm:$0xff] %vm1151, %v1197
        %1287 = vst.msk [vmem:[%s441 + $0x38] sm:$0xff] %vm1151, %v1199
        %1288 = vst.msk [vmem:[%s441 + $0x40] sm:$0xff] %vm1151, %v1201
        %1289 = vst.msk [vmem:[%s441 + $0x48] sm:$0xff] %vm1151, %v1203
        %1290 = vst.msk [vmem:[%s441 + $0x50] sm:$0xff] %vm1151, %v1205
        %1291 = vst.msk [vmem:[%s441 + $0x58] sm:$0xff] %vm1151, %v1207
        %1292 = vst.msk [vmem:[%s441 + $0x60] sm:$0xff] %vm1151, %v1209
        %1293 = vst.msk [vmem:[%s441 + $0x68] sm:$0xff] %vm1151, %v1211
        %1294 = vst.msk [vmem:[%s441 + $0x70] sm:$0xff] %vm1151, %v1213
        %1295 = vst.msk [vmem:[%s441 + $0x78] sm:$0xff] %vm1151, %v1215
        %1296 = vst.msk [vmem:[%s441 + $0x80] sm:$0xff] %vm1151, %v1217
        %1297 = vst.msk [vmem:[%s441 + $0x88] sm:$0xff] %vm1151, %v1219
        %1298 = vst.msk [vmem:[%s441 + $0x90] sm:$0xff] %vm1151, %v1221
        %1299 = vst.msk [vmem:[%s441 + $0x98] sm:$0xff] %vm1151, %v1223
        %1300 = vst.msk [vmem:[%s441 + $0xa0] sm:$0xff] %vm1151, %v1225
        %1301 = vst.msk [vmem:[%s441 + $0xa8] sm:$0xff] %vm1151, %v1227
        %1302 = vst.msk [vmem:[%s441 + $0xb0] sm:$0xff] %vm1151, %v1229
        %1303 = vst.msk [vmem:[%s441 + $0xb8] sm:$0xff] %vm1151, %v1231
        %1304 = vst.msk [vmem:[%s441 + $0xc0] sm:$0xff] %vm1151, %v1233
        %1305 = vst.msk [vmem:[%s441 + $0xc8] sm:$0xff] %vm1151, %v1235
        %1306 = vst.msk [vmem:[%s441 + $0xd0] sm:$0xff] %vm1151, %v1237
        %1307 = vst.msk [vmem:[%s441 + $0xd8] sm:$0xff] %vm1151, %v1239
        %1308 = vst.msk [vmem:[%s441 + $0xe0] sm:$0xff] %vm1151, %v1241
        %1309 = vst.msk [vmem:[%s441 + $0xe8] sm:$0xff] %vm1151, %v1243
        %1310 = vst.msk [vmem:[%s441 + $0xf0] sm:$0xff] %vm1151, %v1245
        %1311 = vst.msk [vmem:[%s441 + $0xf8] sm:$0xff] %vm1151, %v1247
        %vm1312 = vcmask 31744
        %1313 = vst.msk [vmem:[%s451] sm:$0xff] %vm1312, %v767
        %1314 = vst.msk [vmem:[%s451 + $0x8] sm:$0xff] %vm1312, %v770
        %1315 = vst.msk [vmem:[%s451 + $0x10] sm:$0xff] %vm1312, %v773
        %1316 = vst.msk [vmem:[%s451 + $0x18] sm:$0xff] %vm1312, %v776
        %1317 = vst.msk [vmem:[%s451 + $0x20] sm:$0xff] %vm1312, %v779
        %1318 = vst.msk [vmem:[%s451 + $0x28] sm:$0xff] %vm1312, %v782
        %1319 = vst.msk [vmem:[%s451 + $0x30] sm:$0xff] %vm1312, %v785
        %1320 = vst.msk [vmem:[%s451 + $0x38] sm:$0xff] %vm1312, %v788
        %1321 = vst.msk [vmem:[%s451 + $0x40] sm:$0xff] %vm1312, %v791
        %1322 = vst.msk [vmem:[%s451 + $0x48] sm:$0xff] %vm1312, %v794
        %1323 = vst.msk [vmem:[%s451 + $0x50] sm:$0xff] %vm1312, %v797
        %1324 = vst.msk [vmem:[%s451 + $0x58] sm:$0xff] %vm1312, %v800
        %1325 = vst.msk [vmem:[%s451 + $0x60] sm:$0xff] %vm1312, %v803
        %1326 = vst.msk [vmem:[%s451 + $0x68] sm:$0xff] %vm1312, %v806
        %1327 = vst.msk [vmem:[%s451 + $0x70] sm:$0xff] %vm1312, %v809
        %1328 = vst.msk [vmem:[%s451 + $0x78] sm:$0xff] %vm1312, %v812
        %1329 = vst.msk [vmem:[%s451 + $0x80] sm:$0xff] %vm1312, %v815
        %1330 = vst.msk [vmem:[%s451 + $0x88] sm:$0xff] %vm1312, %v818
        %1331 = vst.msk [vmem:[%s451 + $0x90] sm:$0xff] %vm1312, %v821
        %1332 = vst.msk [vmem:[%s451 + $0x98] sm:$0xff] %vm1312, %v824
        %1333 = vst.msk [vmem:[%s451 + $0xa0] sm:$0xff] %vm1312, %v827
        %1334 = vst.msk [vmem:[%s451 + $0xa8] sm:$0xff] %vm1312, %v830
        %1335 = vst.msk [vmem:[%s451 + $0xb0] sm:$0xff] %vm1312, %v833
        %1336 = vst.msk [vmem:[%s451 + $0xb8] sm:$0xff] %vm1312, %v836
        %1337 = vst.msk [vmem:[%s451 + $0xc0] sm:$0xff] %vm1312, %v839
        %1338 = vst.msk [vmem:[%s451 + $0xc8] sm:$0xff] %vm1312, %v842
        %1339 = vst.msk [vmem:[%s451 + $0xd0] sm:$0xff] %vm1312, %v845
        %1340 = vst.msk [vmem:[%s451 + $0xd8] sm:$0xff] %vm1312, %v848
        %1341 = vst.msk [vmem:[%s451 + $0xe0] sm:$0xff] %vm1312, %v851
        %1342 = vst.msk [vmem:[%s451 + $0xe8] sm:$0xff] %vm1312, %v854
        %1343 = vst.msk [vmem:[%s451 + $0xf0] sm:$0xff] %vm1312, %v857
        %1344 = vst.msk [vmem:[%s451 + $0xf8] sm:$0xff] %vm1312, %v860
        %s1345 = smul.u32 32, %s28
        %p1346 = scmp.lt.s32.totalorder %s27, 1
        %s1347 = scalar_select %p1346, %s27, 1
        %p1348 = scmp.lt.s32.totalorder %s1345, 31
        %s1349 = scalar_select %p1348, %s1345, 31
        %s1350 = smul.addr %s1347, 32
        %s1351 = sadd.s32 %s1349, %s1350
        %s1352 = smul.addr %s1351, 8
        %s1353 = scalar_lea.vmem %s3, %s1352
        %s1354 = smul.u32 32, %s28
        %p1355 = scmp.lt.s32.totalorder %s27, 1
        %s1356 = scalar_select %p1355, %s27, 1
        %p1357 = scmp.lt.s32.totalorder %s1354, 31
        %s1358 = scalar_select %p1357, %s1354, 31
        %s1359 = smul.addr %s1356, 32
        %s1360 = sadd.s32 %s1358, %s1359
        %s1361 = smul.addr %s1360, 8
        %s1362 = scalar_lea.vmem %s4, %s1361
        %s1363 = smul.u32 32, %s28
        %p1364 = scmp.lt.s32.totalorder %s27, 1
        %s1365 = scalar_select %p1364, %s27, 1
        %p1366 = scmp.lt.s32.totalorder %s1363, 31
        %s1367 = scalar_select %p1366, %s1363, 31
        %s1368 = smul.addr %s1365, 32
        %s1369 = sadd.s32 %s1367, %s1368
        %s1370 = smul.addr %s1369, 8
        %s1371 = scalar_lea.vmem %s5, %s1370
        %s1372 = smul.u32 32, %s28
        %p1373 = scmp.lt.s32.totalorder %s27, 1
        %s1374 = scalar_select %p1373, %s27, 1
        %p1375 = scmp.lt.s32.totalorder %s1372, 31
        %s1376 = scalar_select %p1375, %s1372, 31
        %s1377 = smul.addr %s1374, 32
        %s1378 = sadd.s32 %s1376, %s1377
        %s1379 = smul.addr %s1378, 8
        %s1380 = scalar_lea.vmem %s6, %s1379
        %s1381 = smul.u32 32, %s28
        %p1382 = scmp.lt.s32.totalorder %s27, 1
        %s1383 = scalar_select %p1382, %s27, 1
        %p1384 = scmp.lt.s32.totalorder %s1381, 31
        %s1385 = scalar_select %p1384, %s1381, 31
        %s1386 = smul.addr %s1383, 32
        %s1387 = sadd.s32 %s1385, %s1386
        %s1388 = smul.addr %s1387, 8
        %s1389 = scalar_lea.vmem %s7, %s1388
        // Predicated region
        $region45: #{tpu_custom_call.1} parent=31 // pred_check
          %p1390 = pneg %p125
        $region46: #{tpu_custom_call.1} parent=31 // pred_check_branch
          %1392 = sbr.rel (%p1390) target = $region48
        $region47: #{tpu_custom_call.1} parent=31 // pred_region
          %s1393 = smul.u32 32, %s28
        $region48: #{tpu_custom_call.1} parent=31 // pred_fallthru
          _
        // Predicated region
        $region49: #{tpu_custom_call.1} parent=31 // pred_check
          %p1394 = pneg %p153
        $region50: #{tpu_custom_call.1} parent=31 // pred_check_branch
          %1396 = sbr.rel (%p1394) target = $region52
        $region51: #{tpu_custom_call.1} parent=31 // pred_region
          %s1397 = smul.u32 32, %s28
        $region52: #{tpu_custom_call.1} parent=31 // pred_fallthru
          _
        // Predicated region
        $region53: #{tpu_custom_call.1} parent=31 // pred_check
          %p1398 = pneg %p181
        $region54: #{tpu_custom_call.1} parent=31 // pred_check_branch
          %1400 = sbr.rel (%p1398) target = $region56
        $region55: #{tpu_custom_call.1} parent=31 // pred_region
          %s1401 = smul.u32 32, %s28
        $region56: #{tpu_custom_call.1} parent=31 // pred_fallthru
          _
        // Predicated region
        $region57: #{tpu_custom_call.1} parent=31 // pred_check
          %p1402 = pneg %p209
        $region58: #{tpu_custom_call.1} parent=31 // pred_check_branch
          %1404 = sbr.rel (%p1402) target = $region60
        $region59: #{tpu_custom_call.1} parent=31 // pred_region
          %s1405 = smul.u32 32, %s28
        $region60: #{tpu_custom_call.1} parent=31 // pred_fallthru
          _
        // Predicated region
        $region61: #{tpu_custom_call.1} parent=31 // pred_check
          %p1406 = pneg %p237
        $region62: #{tpu_custom_call.1} parent=31 // pred_check_branch
          %1408 = sbr.rel (%p1406) target = $region64
        $region63: #{tpu_custom_call.1} parent=31 // pred_region
          %s1409 = smul.u32 32, %s28
        $region64: #{tpu_custom_call.1} parent=31 // pred_fallthru
          _
      $region32: #{tpu_custom_call.1} parent=5 // pred_fallthru
        _
      %p1410 = scmp.le.s32.totalorder 2, %s18
      // Predicated region
      $region65: #{tpu_custom_call.1} parent=5 // pred_check
        %p1411 = pneg %p1410
      $region66: #{tpu_custom_call.1} parent=5 // pred_check_branch
        %1413 = sbr.rel (%p1411) target = $region68
      $region67: #{tpu_custom_call.1} parent=5 // pred_region
        %s1414 = ssub.s32 %s18, 2
        // Predicated region
        $region69: #{tpu_custom_call.1} parent=67 // pred_check
          %p1415 = pneg %p131
        $region70: #{tpu_custom_call.1} parent=67 // pred_check_branch
          %1417 = sbr.rel (%p1415) target = $region72
        $region71: #{tpu_custom_call.1} parent=67 // pred_region
          %s1418 = smul.u32 32, %s30
          %p1419 = scmp.lt.s32.totalorder %s29, 1
          %s1420 = scalar_select %p1419, %s29, 1
          %p1421 = scmp.lt.s32.totalorder %s1418, 31
          %s1422 = scalar_select %p1421, %s1418, 31
          %s1423 = smul.addr %s1420, 32
          %s1424 = sadd.s32 %s1422, %s1423
          %s1425 = smul.addr %s1424, 8
          %s1426 = scalar_lea.vmem %s3, %s1425
        $region72: #{tpu_custom_call.1} parent=67 // pred_fallthru
          _
        // Predicated region
        $region73: #{tpu_custom_call.1} parent=67 // pred_check
          %p1427 = pneg %p159
        $region74: #{tpu_custom_call.1} parent=67 // pred_check_branch
          %1429 = sbr.rel (%p1427) target = $region76
        $region75: #{tpu_custom_call.1} parent=67 // pred_region
          %s1430 = smul.u32 32, %s30
          %p1431 = scmp.lt.s32.totalorder %s29, 1
          %s1432 = scalar_select %p1431, %s29, 1
          %p1433 = scmp.lt.s32.totalorder %s1430, 31
          %s1434 = scalar_select %p1433, %s1430, 31
          %s1435 = smul.addr %s1432, 32
          %s1436 = sadd.s32 %s1434, %s1435
          %s1437 = smul.addr %s1436, 8
          %s1438 = scalar_lea.vmem %s4, %s1437
        $region76: #{tpu_custom_call.1} parent=67 // pred_fallthru
          _
        // Predicated region
        $region77: #{tpu_custom_call.1} parent=67 // pred_check
          %p1439 = pneg %p187
        $region78: #{tpu_custom_call.1} parent=67 // pred_check_branch
          %1441 = sbr.rel (%p1439) target = $region80
        $region79: #{tpu_custom_call.1} parent=67 // pred_region
          %s1442 = smul.u32 32, %s30
          %p1443 = scmp.lt.s32.totalorder %s29, 1
          %s1444 = scalar_select %p1443, %s29, 1
          %p1445 = scmp.lt.s32.totalorder %s1442, 31
          %s1446 = scalar_select %p1445, %s1442, 31
          %s1447 = smul.addr %s1444, 32
          %s1448 = sadd.s32 %s1446, %s1447
          %s1449 = smul.addr %s1448, 8
          %s1450 = scalar_lea.vmem %s5, %s1449
        $region80: #{tpu_custom_call.1} parent=67 // pred_fallthru
          _
        // Predicated region
        $region81: #{tpu_custom_call.1} parent=67 // pred_check
          %p1451 = pneg %p215
        $region82: #{tpu_custom_call.1} parent=67 // pred_check_branch
          %1453 = sbr.rel (%p1451) target = $region84
        $region83: #{tpu_custom_call.1} parent=67 // pred_region
          %s1454 = smul.u32 32, %s30
          %p1455 = scmp.lt.s32.totalorder %s29, 1
          %s1456 = scalar_select %p1455, %s29, 1
          %p1457 = scmp.lt.s32.totalorder %s1454, 31
          %s1458 = scalar_select %p1457, %s1454, 31
          %s1459 = smul.addr %s1456, 32
          %s1460 = sadd.s32 %s1458, %s1459
          %s1461 = smul.addr %s1460, 8
          %s1462 = scalar_lea.vmem %s6, %s1461
        $region84: #{tpu_custom_call.1} parent=67 // pred_fallthru
          _
        // Predicated region
        $region85: #{tpu_custom_call.1} parent=67 // pred_check
          %p1463 = pneg %p243
        $region86: #{tpu_custom_call.1} parent=67 // pred_check_branch
          %1465 = sbr.rel (%p1463) target = $region88
        $region87: #{tpu_custom_call.1} parent=67 // pred_region
          %s1466 = smul.u32 32, %s30
          %p1467 = scmp.lt.s32.totalorder %s29, 1
          %s1468 = scalar_select %p1467, %s29, 1
          %p1469 = scmp.lt.s32.totalorder %s1466, 31
          %s1470 = scalar_select %p1469, %s1466, 31
          %s1471 = smul.addr %s1468, 32
          %s1472 = sadd.s32 %s1470, %s1471
          %s1473 = smul.addr %s1472, 8
          %s1474 = scalar_lea.vmem %s7, %s1473
        $region88: #{tpu_custom_call.1} parent=67 // pred_fallthru
          _
      $region68: #{tpu_custom_call.1} parent=5 // pred_fallthru
        _
    $region6: #{tpu_custom_call.1} parent=1 // loop_footer
      %s22 = sadd.s32 1, %s18
    $region7: #{tpu_custom_call.1} parent=1 // loop_footer_branch
      %17 = sbr.rel target = $region3
    $region8: #{tpu_custom_call.1} parent=1 // loop_exit
      _
    %1475 = vsyncpa [#allocation3], 1
    %s1476 = scalar_lea.sflag [#allocation3], 1
    %1477 = vsyncpa %s1476, 1
    %1478 = vsyncpa [#allocation5], 1

</llo_original>
